<compile_context>
chip_gen: v5e
topology: v5e:2x2
jax: 0.10.0
libtpu: 0.0.40
codegen_flags: <defaults>
</compile_context>

<pallas_src>
import functools
import jax
import jax.numpy as jnp
from jax.experimental import pallas as pl
from jax.experimental.pallas import tpu as pltpu


# ----------------------------- in-kernel helpers -----------------------------

def _layernorm(x, g, b, eps=1e-5):
    # x: (N, C) f32, g/b: (1, C) f32. Biased variance, same as PyTorch LayerNorm.
    mu = jnp.mean(x, axis=-1, keepdims=True)
    xc = x - mu
    var = jnp.mean(xc * xc, axis=-1, keepdims=True)
    return xc * jax.lax.rsqrt(var + eps) * g + b


def _gelu_tanh(x):
    # tanh-approx GELU: tanh lowers to the EUP slot (otherwise idle), freeing the
    # VALU on the largest elementwise tensor in the kernel (the (N, 4C) MLP act).
    # Max abs deviation from the exact-erf nn.GELU() is ~1e-3 (below bf16 matmul noise).
    # TODO(synk): switch to lax.erf if bit-level parity with PyTorch's exact GELU is needed.
    c = 0.7978845608028654  # sqrt(2/pi)
    return 0.5 * x * (1.0 + jnp.tanh(c * (x + 0.044715 * (x * x * x))))


# --------------------------------- the kernel --------------------------------

def _block_kernel(x_ref, ln1g_ref, ln1b_ref, wqkv_ref, wproj_ref, bproj_ref,
                  ln2g_ref, ln2b_ref, w1_ref, b1_ref, w2_ref, b2_ref,
                  o_ref, *, num_heads):
    x = x_ref[...].astype(jnp.float32)                       # (N, C) — batch dim squeezed
    N, C = x.shape
    hd = C // num_heads

    # ---- Attention branch ----------------------------------------------------
    # LayerNorm in f32 on the VPU; cast to bf16 only right before the MXU
    # (v5e has no bf16 VALU/EUP, so elementwise math stays f32 everywhere).
    h1 = _layernorm(x, ln1g_ref[...], ln1b_ref[...]).astype(jnp.bfloat16)
    # Single full-width qkv matmul (full MXU contraction). The 1/sqrt(hd) scale is
    # pre-folded into the q columns of w_qkv by the wrapper — no per-head scaling here.
    qkv = jnp.dot(h1, wqkv_ref[...], preferred_element_type=jnp.float32)   # (N, 3C) f32
    q_all = qkv[:, 0 * C:1 * C]
    k_all = qkv[:, 1 * C:2 * C]
    v_all = qkv[:, 2 * C:3 * C]

    # Per-head attention with the output projection accumulated head-by-head:
    #   acc += softmax(q_h k_h^T) v_h @ W_proj[h*hd:(h+1)*hd, :]
    # This removes the (N, C) head-concat relayout of the naive formulation.
    # TODO(synk): for long sequences, tile the key axis (online softmax) so the
    # (N, N) score matrix and per-head temporaries stay bounded in VMEM.
    acc = jnp.zeros((N, C), jnp.float32)
    for hh in range(num_heads):                               # small static head count
        lo = hh * hd
        qh = q_all[:, lo:lo + hd].astype(jnp.bfloat16)        # (N, hd)
        kh_t = k_all[:, lo:lo + hd].T.astype(jnp.bfloat16)    # (hd, N)
        vh = v_all[:, lo:lo + hd].astype(jnp.bfloat16)        # (N, hd)
        s = jnp.dot(qh, kh_t, preferred_element_type=jnp.float32)          # (N, N) f32
        s = s - jnp.max(s, axis=-1, keepdims=True)
        p = jnp.exp(s)
        p = p * pl.reciprocal(jnp.sum(p, axis=-1, keepdims=True), approx=True)
        oh = jnp.dot(p.astype(jnp.bfloat16), vh, preferred_element_type=jnp.float32)
        acc = acc + jnp.dot(oh.astype(jnp.bfloat16), wproj_ref[lo:lo + hd, :],
                            preferred_element_type=jnp.float32)
    x = x + acc + bproj_ref[...]                              # residual 1 (f32)

    # ---- MLP branch ------------------------------------------------------------
    h2 = _layernorm(x, ln2g_ref[...], ln2b_ref[...]).astype(jnp.bfloat16)
    u = jnp.dot(h2, w1_ref[...], preferred_element_type=jnp.float32) + b1_ref[...]
    u = _gelu_tanh(u)                                         # f32 elementwise
    u = jnp.dot(u.astype(jnp.bfloat16), w2_ref[...],
                preferred_element_type=jnp.float32) + b2_ref[...]
    x = x + u                                                 # residual 2 (f32)

    o_ref[...] = x.astype(o_ref.dtype)


# --------------------------------- wrappers -----------------------------------

def prepare_params(raw, *, num_heads):
    """Fold the attention scale into w_qkv's q columns; cast matmul weights to bf16.

    LayerNorm gammas/betas and the linear biases stay f32 (they are added in f32
    after the f32-accumulated matmuls).
    """
    C = raw["w_qkv"].shape[0]
    hd = C // num_heads
    scale = hd ** (-0.5)
    w_qkv = raw["w_qkv"].at[:, :C].multiply(scale)            # fold 1/sqrt(hd) into q
    p = dict(raw)
    p["w_qkv"] = w_qkv.astype(jnp.bfloat16)
    p["w_proj"] = raw["w_proj"].astype(jnp.bfloat16)
    p["w_fc1"] = raw["w_fc1"].astype(jnp.bfloat16)
    p["w_fc2"] = raw["w_fc2"].astype(jnp.bfloat16)
    return p


def block_forward(x, params, *, num_heads):
    """x: (B, N, C) float32; params: dict from prepare_params (bf16 matmul weights)."""
    B, N, C = x.shape
    hidden = params["w_fc1"].shape[1]
    plist = [
        params["ln1_g"], params["ln1_b"],
        params["w_qkv"],
        params["w_proj"], params["b_proj"],
        params["ln2_g"], params["ln2_b"],
        params["w_fc1"], params["b_fc1"],
        params["w_fc2"], params["b_fc2"],
    ]

    def const_spec(p):
        nd = p.ndim
        return pl.BlockSpec(p.shape, lambda b, _nd=nd: (0,) * _nd)

    # Explicit scoped-VMEM budget: resident weights (possibly double-buffered) +
    # streamed x/out blocks + f32 intermediates, with headroom. Clamped to stay
    # within v7x's 64 MiB physical VMEM while still raising the small default
    # scoped limits (16 MiB on v5e); raise the cap on v5e/v6e (128 MiB) if needed.
    param_bytes = sum(int(p.size) * p.dtype.itemsize for p in plist)
    act_bytes = N * C * x.dtype.itemsize
    temp_bytes = 4 * N * (3 * C + hidden + 2 * C) + 4 * N * N
    vmem_bytes = int(min(max(2 * param_bytes + 4 * act_bytes + 2 * temp_bytes,
                             32 << 20), 64 << 20))

    # TODO(synk): for very small B on v7x (2 TensorCores), add a second "parallel"
    # grid axis over query-row tiles so both cores get work.
    return pl.pallas_call(
        functools.partial(_block_kernel, num_heads=num_heads),
        out_shape=jax.ShapeDtypeStruct((B, N, C), x.dtype),
        grid=(B,),
        in_specs=[pl.BlockSpec((pl.Squeezed(), N, C), lambda b: (b, 0, 0))]
                 + [const_spec(p) for p in plist],
        out_specs=pl.BlockSpec((pl.Squeezed(), N, C), lambda b: (b, 0, 0)),
        compiler_params=pltpu.CompilerParams(
            dimension_semantics=("parallel",),
            vmem_limit_bytes=vmem_bytes),
    )(x, *plist)


# --------------------------------- main ---------------------------------------

if __name__ == "__main__":
    B, N, C = 2, 8, 32
    num_heads = 4
    hidden = int(C * 4.0)   # mlp_ratio = 4

    key = jax.random.PRNGKey(0)
    ks = jax.random.split(key, 8)

    # Deterministic synthetic parameters (PyTorch stores (out, in); we store (in, out)).
    raw_params = {
        "ln1_g":  jnp.ones((1, C), jnp.float32),
        "ln1_b":  jnp.zeros((1, C), jnp.float32),
        "w_qkv":  0.02 * jax.random.normal(ks[0], (C, 3 * C), jnp.float32),   # qkv_bias=False
        "w_proj": 0.02 * jax.random.normal(ks[1], (C, C), jnp.float32),
        "b_proj": 0.02 * jax.random.normal(ks[2], (1, C), jnp.float32),
        "ln2_g":  jnp.ones((1, C), jnp.float32),
        "ln2_b":  jnp.zeros((1, C), jnp.float32),
        "w_fc1":  0.02 * jax.random.normal(ks[3], (C, hidden), jnp.float32),
        "b_fc1":  0.02 * jax.random.normal(ks[4], (1, hidden), jnp.float32),
        "w_fc2":  0.02 * jax.random.normal(ks[5], (hidden, C), jnp.float32),
        "b_fc2":  0.02 * jax.random.normal(ks[6], (1, C), jnp.float32),
    }
    params = prepare_params(raw_params, num_heads=num_heads)

    x = jax.random.normal(ks[7], (B, N, C), jnp.float32)

    out = block_forward(x, params, num_heads=num_heads)
    jax.block_until_ready(out)
    assert out.shape == (B, N, C) and out.dtype == jnp.float32
    print("KERNEL_OK")
</pallas_src>

<mosaic_0001>
module attributes {stable_mosaic.version = 11 : i64} {
  func.func @_block_kernel(%arg0: i32, %arg1: memref<1x8x32xf32, #tpu.memory_space<vmem>>, %arg2: memref<1x32xf32, #tpu.memory_space<vmem>>, %arg3: memref<1x32xf32, #tpu.memory_space<vmem>>, %arg4: memref<32x96xbf16, #tpu.memory_space<vmem>>, %arg5: memref<32x32xbf16, #tpu.memory_space<vmem>>, %arg6: memref<1x32xf32, #tpu.memory_space<vmem>>, %arg7: memref<1x32xf32, #tpu.memory_space<vmem>>, %arg8: memref<1x32xf32, #tpu.memory_space<vmem>>, %arg9: memref<32x128xbf16, #tpu.memory_space<vmem>>, %arg10: memref<1x128xf32, #tpu.memory_space<vmem>>, %arg11: memref<128x32xbf16, #tpu.memory_space<vmem>>, %arg12: memref<1x32xf32, #tpu.memory_space<vmem>>, %arg13: memref<1x8x32xf32, #tpu.memory_space<vmem>>) attributes {dimension_semantics = [#tpu.dimension_semantics<parallel>], iteration_bounds = array<i64: 2>, scalar_prefetch = 0 : i64, scratch_operands = 0 : i64, tpu.core_type = #tpu.core_type<tc>, window_params = [{transform_indices = @transform_0, window_bounds = array<i64: 1, 8, 32>}, {pipeline_mode = #tpu.pipeline_mode<synchronous>, transform_indices = @transform_1, window_bounds = array<i64: 1, 32>}, {pipeline_mode = #tpu.pipeline_mode<synchronous>, transform_indices = @transform_2, window_bounds = array<i64: 1, 32>}, {pipeline_mode = #tpu.pipeline_mode<synchronous>, transform_indices = @transform_3, window_bounds = array<i64: 32, 96>}, {pipeline_mode = #tpu.pipeline_mode<synchronous>, transform_indices = @transform_4, window_bounds = array<i64: 32, 32>}, {pipeline_mode = #tpu.pipeline_mode<synchronous>, transform_indices = @transform_5, window_bounds = array<i64: 1, 32>}, {pipeline_mode = #tpu.pipeline_mode<synchronous>, transform_indices = @transform_6, window_bounds = array<i64: 1, 32>}, {pipeline_mode = #tpu.pipeline_mode<synchronous>, transform_indices = @transform_7, window_bounds = array<i64: 1, 32>}, {pipeline_mode = #tpu.pipeline_mode<synchronous>, transform_indices = @transform_8, window_bounds = array<i64: 32, 128>}, {pipeline_mode = #tpu.pipeline_mode<synchronous>, transform_indices = @transform_9, window_bounds = array<i64: 1, 128>}, {pipeline_mode = #tpu.pipeline_mode<synchronous>, transform_indices = @transform_10, window_bounds = array<i64: 128, 32>}, {pipeline_mode = #tpu.pipeline_mode<synchronous>, transform_indices = @transform_11, window_bounds = array<i64: 1, 32>}, {transform_indices = @transform_12, window_bounds = array<i64: 1, 8, 32>}]} {
    %c0 = arith.constant 0 : index
    %c0_0 = arith.constant 0 : index
    %c0_1 = arith.constant 0 : index
    %0 = vector.load %arg1[%c0, %c0_0, %c0_1] : memref<1x8x32xf32, #tpu.memory_space<vmem>>, vector<1x8x32xf32>
    %1 = vector.shape_cast %0 : vector<1x8x32xf32> to vector<8x32xf32>
    %c0_2 = arith.constant 0 : index
    %c0_3 = arith.constant 0 : index
    %2 = vector.load %arg2[%c0_2, %c0_3] : memref<1x32xf32, #tpu.memory_space<vmem>>, vector<1x32xf32>
    %c0_4 = arith.constant 0 : index
    %c0_5 = arith.constant 0 : index
    %3 = vector.load %arg3[%c0_4, %c0_5] : memref<1x32xf32, #tpu.memory_space<vmem>>, vector<1x32xf32>
    %cst = arith.constant dense<0.000000e+00> : vector<8xf32>
    %4 = vector.multi_reduction <add>, %1, %cst [1] : vector<8x32xf32> to vector<8xf32>
    %5 = vector.shape_cast %4 : vector<8xf32> to vector<8x1xf32>
    %cst_6 = arith.constant 3.200000e+01 : f32
    %6 = vector.broadcast %cst_6 : f32 to vector<8x1xf32>
    %7 = arith.divf %5, %6 : vector<8x1xf32>
    %8 = vector.broadcast %7 : vector<8x1xf32> to vector<8x32xf32>
    %9 = arith.subf %1, %8 : vector<8x32xf32>
    %10 = arith.mulf %9, %9 : vector<8x32xf32>
    %cst_7 = arith.constant dense<0.000000e+00> : vector<8xf32>
    %11 = vector.multi_reduction <add>, %10, %cst_7 [1] : vector<8x32xf32> to vector<8xf32>
    %12 = vector.shape_cast %11 : vector<8xf32> to vector<8x1xf32>
    %cst_8 = arith.constant 3.200000e+01 : f32
    %13 = vector.broadcast %cst_8 : f32 to vector<8x1xf32>
    %14 = arith.divf %12, %13 : vector<8x1xf32>
    %cst_9 = arith.constant 9.99999974E-6 : f32
    %15 = vector.broadcast %cst_9 : f32 to vector<8x1xf32>
    %16 = arith.addf %14, %15 : vector<8x1xf32>
    %17 = math.rsqrt %16 : vector<8x1xf32>
    %18 = vector.broadcast %17 : vector<8x1xf32> to vector<8x32xf32>
    %19 = arith.mulf %9, %18 : vector<8x32xf32>
    %20 = vector.broadcast %2 : vector<1x32xf32> to vector<8x32xf32>
    %21 = arith.mulf %19, %20 : vector<8x32xf32>
    %22 = vector.broadcast %3 : vector<1x32xf32> to vector<8x32xf32>
    %23 = arith.addf %21, %22 : vector<8x32xf32>
    %24 = arith.truncf %23 : vector<8x32xf32> to vector<8x32xbf16>
    %c0_10 = arith.constant 0 : index
    %c0_11 = arith.constant 0 : index
    %25 = vector.load %arg4[%c0_10, %c0_11] : memref<32x96xbf16, #tpu.memory_space<vmem>>, vector<32x96xbf16>
    %cst_12 = arith.constant dense<0.000000e+00> : vector<8x96xf32>
    %26 = tpu.matmul %24, %25, %cst_12 {dimension_numbers = #tpu.dot_dimension_numbers<[1], [0], [0], [1], [0, 0, 1, 1], [], []>} : vector<8x32xbf16>, vector<32x96xbf16>, vector<8x96xf32> -> vector<8x96xf32>
    %27 = vector.extract_strided_slice %26 {offsets = [0, 0], sizes = [8, 32], strides = [1, 1]} : vector<8x96xf32> to vector<8x32xf32>
    %28 = vector.extract_strided_slice %26 {offsets = [0, 32], sizes = [8, 32], strides = [1, 1]} : vector<8x96xf32> to vector<8x32xf32>
    %29 = vector.extract_strided_slice %26 {offsets = [0, 64], sizes = [8, 32], strides = [1, 1]} : vector<8x96xf32> to vector<8x32xf32>
    %cst_13 = arith.constant 0.000000e+00 : f32
    %30 = vector.broadcast %cst_13 : f32 to vector<8x32xf32>
    %31 = vector.extract_strided_slice %27 {offsets = [0, 0], sizes = [8, 8], strides = [1, 1]} : vector<8x32xf32> to vector<8x8xf32>
    %32 = arith.truncf %31 : vector<8x8xf32> to vector<8x8xbf16>
    %33 = vector.extract_strided_slice %28 {offsets = [0, 0], sizes = [8, 8], strides = [1, 1]} : vector<8x32xf32> to vector<8x8xf32>
    %34 = tpu.transpose %33, [1, 0] : vector<8x8xf32> -> vector<8x8xf32>
    %35 = arith.truncf %34 : vector<8x8xf32> to vector<8x8xbf16>
    %36 = vector.extract_strided_slice %29 {offsets = [0, 0], sizes = [8, 8], strides = [1, 1]} : vector<8x32xf32> to vector<8x8xf32>
    %37 = arith.truncf %36 : vector<8x8xf32> to vector<8x8xbf16>
    %cst_14 = arith.constant dense<0.000000e+00> : vector<8x8xf32>
    %38 = tpu.matmul %32, %35, %cst_14 {dimension_numbers = #tpu.dot_dimension_numbers<[1], [0], [0], [1], [0, 0, 1, 1], [], []>} : vector<8x8xbf16>, vector<8x8xbf16>, vector<8x8xf32> -> vector<8x8xf32>
    %cst_15 = arith.constant dense<0xFF800000> : vector<8xf32>
    %39 = vector.multi_reduction <maximumf>, %38, %cst_15 [1] : vector<8x8xf32> to vector<8xf32>
    %40 = vector.shape_cast %39 : vector<8xf32> to vector<8x1xf32>
    %41 = vector.broadcast %40 : vector<8x1xf32> to vector<8x8xf32>
    %42 = arith.subf %38, %41 : vector<8x8xf32>
    %43 = math.exp %42 : vector<8x8xf32>
    %cst_16 = arith.constant dense<0.000000e+00> : vector<8xf32>
    %44 = vector.multi_reduction <add>, %43, %cst_16 [1] : vector<8x8xf32> to vector<8xf32>
    %45 = vector.shape_cast %44 : vector<8xf32> to vector<8x1xf32>
    %46 = tpu.reciprocal %45 {approx = true} : vector<8x1xf32> -> vector<8x1xf32>
    %47 = vector.broadcast %46 : vector<8x1xf32> to vector<8x8xf32>
    %48 = arith.mulf %43, %47 : vector<8x8xf32>
    %49 = arith.truncf %48 : vector<8x8xf32> to vector<8x8xbf16>
    %cst_17 = arith.constant dense<0.000000e+00> : vector<8x8xf32>
    %50 = tpu.matmul %49, %37, %cst_17 {dimension_numbers = #tpu.dot_dimension_numbers<[1], [0], [0], [1], [0, 0, 1, 1], [], []>} : vector<8x8xbf16>, vector<8x8xbf16>, vector<8x8xf32> -> vector<8x8xf32>
    %51 = arith.truncf %50 : vector<8x8xf32> to vector<8x8xbf16>
    %c0_18 = arith.constant 0 : index
    %c0_19 = arith.constant 0 : index
    %52 = vector.load %arg5[%c0_18, %c0_19] : memref<32x32xbf16, #tpu.memory_space<vmem>>, vector<8x32xbf16>
    %cst_20 = arith.constant dense<0.000000e+00> : vector<8x32xf32>
    %53 = tpu.matmul %51, %52, %cst_20 {dimension_numbers = #tpu.dot_dimension_numbers<[1], [0], [0], [1], [0, 0, 1, 1], [], []>} : vector<8x8xbf16>, vector<8x32xbf16>, vector<8x32xf32> -> vector<8x32xf32>
    %54 = arith.addf %30, %53 : vector<8x32xf32>
    %55 = vector.extract_strided_slice %27 {offsets = [0, 8], sizes = [8, 8], strides = [1, 1]} : vector<8x32xf32> to vector<8x8xf32>
    %56 = arith.truncf %55 : vector<8x8xf32> to vector<8x8xbf16>
    %57 = vector.extract_strided_slice %28 {offsets = [0, 8], sizes = [8, 8], strides = [1, 1]} : vector<8x32xf32> to vector<8x8xf32>
    %58 = tpu.transpose %57, [1, 0] : vector<8x8xf32> -> vector<8x8xf32>
    %59 = arith.truncf %58 : vector<8x8xf32> to vector<8x8xbf16>
    %60 = vector.extract_strided_slice %29 {offsets = [0, 8], sizes = [8, 8], strides = [1, 1]} : vector<8x32xf32> to vector<8x8xf32>
    %61 = arith.truncf %60 : vector<8x8xf32> to vector<8x8xbf16>
    %cst_21 = arith.constant dense<0.000000e+00> : vector<8x8xf32>
    %62 = tpu.matmul %56, %59, %cst_21 {dimension_numbers = #tpu.dot_dimension_numbers<[1], [0], [0], [1], [0, 0, 1, 1], [], []>} : vector<8x8xbf16>, vector<8x8xbf16>, vector<8x8xf32> -> vector<8x8xf32>
    %cst_22 = arith.constant dense<0xFF800000> : vector<8xf32>
    %63 = vector.multi_reduction <maximumf>, %62, %cst_22 [1] : vector<8x8xf32> to vector<8xf32>
    %64 = vector.shape_cast %63 : vector<8xf32> to vector<8x1xf32>
    %65 = vector.broadcast %64 : vector<8x1xf32> to vector<8x8xf32>
    %66 = arith.subf %62, %65 : vector<8x8xf32>
    %67 = math.exp %66 : vector<8x8xf32>
    %cst_23 = arith.constant dense<0.000000e+00> : vector<8xf32>
    %68 = vector.multi_reduction <add>, %67, %cst_23 [1] : vector<8x8xf32> to vector<8xf32>
    %69 = vector.shape_cast %68 : vector<8xf32> to vector<8x1xf32>
    %70 = tpu.reciprocal %69 {approx = true} : vector<8x1xf32> -> vector<8x1xf32>
    %71 = vector.broadcast %70 : vector<8x1xf32> to vector<8x8xf32>
    %72 = arith.mulf %67, %71 : vector<8x8xf32>
    %73 = arith.truncf %72 : vector<8x8xf32> to vector<8x8xbf16>
    %cst_24 = arith.constant dense<0.000000e+00> : vector<8x8xf32>
    %74 = tpu.matmul %73, %61, %cst_24 {dimension_numbers = #tpu.dot_dimension_numbers<[1], [0], [0], [1], [0, 0, 1, 1], [], []>} : vector<8x8xbf16>, vector<8x8xbf16>, vector<8x8xf32> -> vector<8x8xf32>
    %75 = arith.truncf %74 : vector<8x8xf32> to vector<8x8xbf16>
    %c8 = arith.constant 8 : index
    %c0_25 = arith.constant 0 : index
    %76 = vector.load %arg5[%c8, %c0_25] : memref<32x32xbf16, #tpu.memory_space<vmem>>, vector<8x32xbf16>
    %cst_26 = arith.constant dense<0.000000e+00> : vector<8x32xf32>
    %77 = tpu.matmul %75, %76, %cst_26 {dimension_numbers = #tpu.dot_dimension_numbers<[1], [0], [0], [1], [0, 0, 1, 1], [], []>} : vector<8x8xbf16>, vector<8x32xbf16>, vector<8x32xf32> -> vector<8x32xf32>
    %78 = arith.addf %54, %77 : vector<8x32xf32>
    %79 = vector.extract_strided_slice %27 {offsets = [0, 16], sizes = [8, 8], strides = [1, 1]} : vector<8x32xf32> to vector<8x8xf32>
    %80 = arith.truncf %79 : vector<8x8xf32> to vector<8x8xbf16>
    %81 = vector.extract_strided_slice %28 {offsets = [0, 16], sizes = [8, 8], strides = [1, 1]} : vector<8x32xf32> to vector<8x8xf32>
    %82 = tpu.transpose %81, [1, 0] : vector<8x8xf32> -> vector<8x8xf32>
    %83 = arith.truncf %82 : vector<8x8xf32> to vector<8x8xbf16>
    %84 = vector.extract_strided_slice %29 {offsets = [0, 16], sizes = [8, 8], strides = [1, 1]} : vector<8x32xf32> to vector<8x8xf32>
    %85 = arith.truncf %84 : vector<8x8xf32> to vector<8x8xbf16>
    %cst_27 = arith.constant dense<0.000000e+00> : vector<8x8xf32>
    %86 = tpu.matmul %80, %83, %cst_27 {dimension_numbers = #tpu.dot_dimension_numbers<[1], [0], [0], [1], [0, 0, 1, 1], [], []>} : vector<8x8xbf16>, vector<8x8xbf16>, vector<8x8xf32> -> vector<8x8xf32>
    %cst_28 = arith.constant dense<0xFF800000> : vector<8xf32>
    %87 = vector.multi_reduction <maximumf>, %86, %cst_28 [1] : vector<8x8xf32> to vector<8xf32>
    %88 = vector.shape_cast %87 : vector<8xf32> to vector<8x1xf32>
    %89 = vector.broadcast %88 : vector<8x1xf32> to vector<8x8xf32>
    %90 = arith.subf %86, %89 : vector<8x8xf32>
    %91 = math.exp %90 : vector<8x8xf32>
    %cst_29 = arith.constant dense<0.000000e+00> : vector<8xf32>
    %92 = vector.multi_reduction <add>, %91, %cst_29 [1] : vector<8x8xf32> to vector<8xf32>
    %93 = vector.shape_cast %92 : vector<8xf32> to vector<8x1xf32>
    %94 = tpu.reciprocal %93 {approx = true} : vector<8x1xf32> -> vector<8x1xf32>
    %95 = vector.broadcast %94 : vector<8x1xf32> to vector<8x8xf32>
    %96 = arith.mulf %91, %95 : vector<8x8xf32>
    %97 = arith.truncf %96 : vector<8x8xf32> to vector<8x8xbf16>
    %cst_30 = arith.constant dense<0.000000e+00> : vector<8x8xf32>
    %98 = tpu.matmul %97, %85, %cst_30 {dimension_numbers = #tpu.dot_dimension_numbers<[1], [0], [0], [1], [0, 0, 1, 1], [], []>} : vector<8x8xbf16>, vector<8x8xbf16>, vector<8x8xf32> -> vector<8x8xf32>
    %99 = arith.truncf %98 : vector<8x8xf32> to vector<8x8xbf16>
    %c16 = arith.constant 16 : index
    %c0_31 = arith.constant 0 : index
    %100 = vector.load %arg5[%c16, %c0_31] : memref<32x32xbf16, #tpu.memory_space<vmem>>, vector<8x32xbf16>
    %cst_32 = arith.constant dense<0.000000e+00> : vector<8x32xf32>
    %101 = tpu.matmul %99, %100, %cst_32 {dimension_numbers = #tpu.dot_dimension_numbers<[1], [0], [0], [1], [0, 0, 1, 1], [], []>} : vector<8x8xbf16>, vector<8x32xbf16>, vector<8x32xf32> -> vector<8x32xf32>
    %102 = arith.addf %78, %101 : vector<8x32xf32>
    %103 = vector.extract_strided_slice %27 {offsets = [0, 24], sizes = [8, 8], strides = [1, 1]} : vector<8x32xf32> to vector<8x8xf32>
    %104 = arith.truncf %103 : vector<8x8xf32> to vector<8x8xbf16>
    %105 = vector.extract_strided_slice %28 {offsets = [0, 24], sizes = [8, 8], strides = [1, 1]} : vector<8x32xf32> to vector<8x8xf32>
    %106 = tpu.transpose %105, [1, 0] : vector<8x8xf32> -> vector<8x8xf32>
    %107 = arith.truncf %106 : vector<8x8xf32> to vector<8x8xbf16>
    %108 = vector.extract_strided_slice %29 {offsets = [0, 24], sizes = [8, 8], strides = [1, 1]} : vector<8x32xf32> to vector<8x8xf32>
    %109 = arith.truncf %108 : vector<8x8xf32> to vector<8x8xbf16>
    %cst_33 = arith.constant dense<0.000000e+00> : vector<8x8xf32>
    %110 = tpu.matmul %104, %107, %cst_33 {dimension_numbers = #tpu.dot_dimension_numbers<[1], [0], [0], [1], [0, 0, 1, 1], [], []>} : vector<8x8xbf16>, vector<8x8xbf16>, vector<8x8xf32> -> vector<8x8xf32>
    %cst_34 = arith.constant dense<0xFF800000> : vector<8xf32>
    %111 = vector.multi_reduction <maximumf>, %110, %cst_34 [1] : vector<8x8xf32> to vector<8xf32>
    %112 = vector.shape_cast %111 : vector<8xf32> to vector<8x1xf32>
    %113 = vector.broadcast %112 : vector<8x1xf32> to vector<8x8xf32>
    %114 = arith.subf %110, %113 : vector<8x8xf32>
    %115 = math.exp %114 : vector<8x8xf32>
    %cst_35 = arith.constant dense<0.000000e+00> : vector<8xf32>
    %116 = vector.multi_reduction <add>, %115, %cst_35 [1] : vector<8x8xf32> to vector<8xf32>
    %117 = vector.shape_cast %116 : vector<8xf32> to vector<8x1xf32>
    %118 = tpu.reciprocal %117 {approx = true} : vector<8x1xf32> -> vector<8x1xf32>
    %119 = vector.broadcast %118 : vector<8x1xf32> to vector<8x8xf32>
    %120 = arith.mulf %115, %119 : vector<8x8xf32>
    %121 = arith.truncf %120 : vector<8x8xf32> to vector<8x8xbf16>
    %cst_36 = arith.constant dense<0.000000e+00> : vector<8x8xf32>
    %122 = tpu.matmul %121, %109, %cst_36 {dimension_numbers = #tpu.dot_dimension_numbers<[1], [0], [0], [1], [0, 0, 1, 1], [], []>} : vector<8x8xbf16>, vector<8x8xbf16>, vector<8x8xf32> -> vector<8x8xf32>
    %123 = arith.truncf %122 : vector<8x8xf32> to vector<8x8xbf16>
    %c24 = arith.constant 24 : index
    %c0_37 = arith.constant 0 : index
    %124 = vector.load %arg5[%c24, %c0_37] : memref<32x32xbf16, #tpu.memory_space<vmem>>, vector<8x32xbf16>
    %cst_38 = arith.constant dense<0.000000e+00> : vector<8x32xf32>
    %125 = tpu.matmul %123, %124, %cst_38 {dimension_numbers = #tpu.dot_dimension_numbers<[1], [0], [0], [1], [0, 0, 1, 1], [], []>} : vector<8x8xbf16>, vector<8x32xbf16>, vector<8x32xf32> -> vector<8x32xf32>
    %126 = arith.addf %102, %125 : vector<8x32xf32>
    %127 = arith.addf %1, %126 : vector<8x32xf32>
    %c0_39 = arith.constant 0 : index
    %c0_40 = arith.constant 0 : index
    %128 = vector.load %arg6[%c0_39, %c0_40] : memref<1x32xf32, #tpu.memory_space<vmem>>, vector<1x32xf32>
    %129 = vector.broadcast %128 : vector<1x32xf32> to vector<8x32xf32>
    %130 = arith.addf %127, %129 : vector<8x32xf32>
    %c0_41 = arith.constant 0 : index
    %c0_42 = arith.constant 0 : index
    %131 = vector.load %arg7[%c0_41, %c0_42] : memref<1x32xf32, #tpu.memory_space<vmem>>, vector<1x32xf32>
    %c0_43 = arith.constant 0 : index
    %c0_44 = arith.constant 0 : index
    %132 = vector.load %arg8[%c0_43, %c0_44] : memref<1x32xf32, #tpu.memory_space<vmem>>, vector<1x32xf32>
    %cst_45 = arith.constant dense<0.000000e+00> : vector<8xf32>
    %133 = vector.multi_reduction <add>, %130, %cst_45 [1] : vector<8x32xf32> to vector<8xf32>
    %134 = vector.shape_cast %133 : vector<8xf32> to vector<8x1xf32>
    %cst_46 = arith.constant 3.200000e+01 : f32
    %135 = vector.broadcast %cst_46 : f32 to vector<8x1xf32>
    %136 = arith.divf %134, %135 : vector<8x1xf32>
    %137 = vector.broadcast %136 : vector<8x1xf32> to vector<8x32xf32>
    %138 = arith.subf %130, %137 : vector<8x32xf32>
    %139 = arith.mulf %138, %138 : vector<8x32xf32>
    %cst_47 = arith.constant dense<0.000000e+00> : vector<8xf32>
    %140 = vector.multi_reduction <add>, %139, %cst_47 [1] : vector<8x32xf32> to vector<8xf32>
    %141 = vector.shape_cast %140 : vector<8xf32> to vector<8x1xf32>
    %cst_48 = arith.constant 3.200000e+01 : f32
    %142 = vector.broadcast %cst_48 : f32 to vector<8x1xf32>
    %143 = arith.divf %141, %142 : vector<8x1xf32>
    %cst_49 = arith.constant 9.99999974E-6 : f32
    %144 = vector.broadcast %cst_49 : f32 to vector<8x1xf32>
    %145 = arith.addf %143, %144 : vector<8x1xf32>
    %146 = math.rsqrt %145 : vector<8x1xf32>
    %147 = vector.broadcast %146 : vector<8x1xf32> to vector<8x32xf32>
    %148 = arith.mulf %138, %147 : vector<8x32xf32>
    %149 = vector.broadcast %131 : vector<1x32xf32> to vector<8x32xf32>
    %150 = arith.mulf %148, %149 : vector<8x32xf32>
    %151 = vector.broadcast %132 : vector<1x32xf32> to vector<8x32xf32>
    %152 = arith.addf %150, %151 : vector<8x32xf32>
    %153 = arith.truncf %152 : vector<8x32xf32> to vector<8x32xbf16>
    %c0_50 = arith.constant 0 : index
    %c0_51 = arith.constant 0 : index
    %154 = vector.load %arg9[%c0_50, %c0_51] : memref<32x128xbf16, #tpu.memory_space<vmem>>, vector<32x128xbf16>
    %cst_52 = arith.constant dense<0.000000e+00> : vector<8x128xf32>
    %155 = tpu.matmul %153, %154, %cst_52 {dimension_numbers = #tpu.dot_dimension_numbers<[1], [0], [0], [1], [0, 0, 1, 1], [], []>} : vector<8x32xbf16>, vector<32x128xbf16>, vector<8x128xf32> -> vector<8x128xf32>
    %c0_53 = arith.constant 0 : index
    %c0_54 = arith.constant 0 : index
    %156 = vector.load %arg10[%c0_53, %c0_54] : memref<1x128xf32, #tpu.memory_space<vmem>>, vector<1x128xf32>
    %157 = vector.broadcast %156 : vector<1x128xf32> to vector<8x128xf32>
    %158 = arith.addf %155, %157 : vector<8x128xf32>
    %cst_55 = arith.constant 5.000000e-01 : f32
    %159 = vector.broadcast %cst_55 : f32 to vector<8x128xf32>
    %160 = arith.mulf %159, %158 : vector<8x128xf32>
    %161 = arith.mulf %158, %158 : vector<8x128xf32>
    %162 = arith.mulf %161, %158 : vector<8x128xf32>
    %cst_56 = arith.constant 4.471500e-02 : f32
    %163 = vector.broadcast %cst_56 : f32 to vector<8x128xf32>
    %164 = arith.mulf %163, %162 : vector<8x128xf32>
    %165 = arith.addf %158, %164 : vector<8x128xf32>
    %cst_57 = arith.constant 0.797884583 : f32
    %166 = vector.broadcast %cst_57 : f32 to vector<8x128xf32>
    %167 = arith.mulf %166, %165 : vector<8x128xf32>
    %168 = math.tanh %167 : vector<8x128xf32>
    %cst_58 = arith.constant 1.000000e+00 : f32
    %169 = vector.broadcast %cst_58 : f32 to vector<8x128xf32>
    %170 = arith.addf %169, %168 : vector<8x128xf32>
    %171 = arith.mulf %160, %170 : vector<8x128xf32>
    %172 = arith.truncf %171 : vector<8x128xf32> to vector<8x128xbf16>
    %c0_59 = arith.constant 0 : index
    %c0_60 = arith.constant 0 : index
    %173 = vector.load %arg11[%c0_59, %c0_60] : memref<128x32xbf16, #tpu.memory_space<vmem>>, vector<128x32xbf16>
    %cst_61 = arith.constant dense<0.000000e+00> : vector<8x32xf32>
    %174 = tpu.matmul %172, %173, %cst_61 {dimension_numbers = #tpu.dot_dimension_numbers<[1], [0], [0], [1], [0, 0, 1, 1], [], []>} : vector<8x128xbf16>, vector<128x32xbf16>, vector<8x32xf32> -> vector<8x32xf32>
    %c0_62 = arith.constant 0 : index
    %c0_63 = arith.constant 0 : index
    %175 = vector.load %arg12[%c0_62, %c0_63] : memref<1x32xf32, #tpu.memory_space<vmem>>, vector<1x32xf32>
    %176 = vector.broadcast %175 : vector<1x32xf32> to vector<8x32xf32>
    %177 = arith.addf %174, %176 : vector<8x32xf32>
    %178 = arith.addf %130, %177 : vector<8x32xf32>
    %c0_64 = arith.constant 0 : index
    %c0_65 = arith.constant 0 : index
    %c0_66 = arith.constant 0 : index
    %179 = vector.load %arg13[%c0_64, %c0_65, %c0_66] : memref<1x8x32xf32, #tpu.memory_space<vmem>>, vector<1x8x32xf32>
    %180 = vector.shape_cast %179 : vector<1x8x32xf32> to vector<8x32xf32>
    %181 = vector.shape_cast %178 : vector<8x32xf32> to vector<1x8x32xf32>
    tpu.vector_store %arg13[%c0_64, %c0_65, %c0_66], %181 {strides = array<i32>} : memref<1x8x32xf32, #tpu.memory_space<vmem>>, vector<1x8x32xf32>,
    return
  }
  func.func @transform_0(%arg0: i32) -> (i32, i32, i32) {
    %c0_i32 = arith.constant 0 : i32
    %c0_i32_0 = arith.constant 0 : i32
    %c0_i32_1 = arith.constant 0 : i32
    return %arg0, %c0_i32, %c0_i32_0 : i32, i32, i32
  }
  func.func @transform_1(%arg0: i32) -> (i32, i32) {
    %c0_i32 = arith.constant 0 : i32
    %c0_i32_0 = arith.constant 0 : i32
    %c0_i32_1 = arith.constant 0 : i32
    return %c0_i32, %c0_i32_0 : i32, i32
  }
  func.func @transform_2(%arg0: i32) -> (i32, i32) {
    %c0_i32 = arith.constant 0 : i32
    %c0_i32_0 = arith.constant 0 : i32
    %c0_i32_1 = arith.constant 0 : i32
    return %c0_i32, %c0_i32_0 : i32, i32
  }
  func.func @transform_3(%arg0: i32) -> (i32, i32) {
    %c0_i32 = arith.constant 0 : i32
    %c0_i32_0 = arith.constant 0 : i32
    %c0_i32_1 = arith.constant 0 : i32
    return %c0_i32, %c0_i32_0 : i32, i32
  }
  func.func @transform_4(%arg0: i32) -> (i32, i32) {
    %c0_i32 = arith.constant 0 : i32
    %c0_i32_0 = arith.constant 0 : i32
    %c0_i32_1 = arith.constant 0 : i32
    return %c0_i32, %c0_i32_0 : i32, i32
  }
  func.func @transform_5(%arg0: i32) -> (i32, i32) {
    %c0_i32 = arith.constant 0 : i32
    %c0_i32_0 = arith.constant 0 : i32
    %c0_i32_1 = arith.constant 0 : i32
    return %c0_i32, %c0_i32_0 : i32, i32
  }
  func.func @transform_6(%arg0: i32) -> (i32, i32) {
    %c0_i32 = arith.constant 0 : i32
    %c0_i32_0 = arith.constant 0 : i32
    %c0_i32_1 = arith.constant 0 : i32
    return %c0_i32, %c0_i32_0 : i32, i32
  }
  func.func @transform_7(%arg0: i32) -> (i32, i32) {
    %c0_i32 = arith.constant 0 : i32
    %c0_i32_0 = arith.constant 0 : i32
    %c0_i32_1 = arith.constant 0 : i32
    return %c0_i32, %c0_i32_0 : i32, i32
  }
  func.func @transform_8(%arg0: i32) -> (i32, i32) {
    %c0_i32 = arith.constant 0 : i32
    %c0_i32_0 = arith.constant 0 : i32
    %c0_i32_1 = arith.constant 0 : i32
    return %c0_i32, %c0_i32_0 : i32, i32
  }
  func.func @transform_9(%arg0: i32) -> (i32, i32) {
    %c0_i32 = arith.constant 0 : i32
    %c0_i32_0 = arith.constant 0 : i32
    %c0_i32_1 = arith.constant 0 : i32
    return %c0_i32, %c0_i32_0 : i32, i32
  }
  func.func @transform_10(%arg0: i32) -> (i32, i32) {
    %c0_i32 = arith.constant 0 : i32
    %c0_i32_0 = arith.constant 0 : i32
    %c0_i32_1 = arith.constant 0 : i32
    return %c0_i32, %c0_i32_0 : i32, i32
  }
  func.func @transform_11(%arg0: i32) -> (i32, i32) {
    %c0_i32 = arith.constant 0 : i32
    %c0_i32_0 = arith.constant 0 : i32
    %c0_i32_1 = arith.constant 0 : i32
    return %c0_i32, %c0_i32_0 : i32, i32
  }
  func.func @transform_12(%arg0: i32) -> (i32, i32, i32) {
    %c0_i32 = arith.constant 0 : i32
    %c0_i32_0 = arith.constant 0 : i32
    %c0_i32_1 = arith.constant 0 : i32
    return %arg0, %c0_i32, %c0_i32_0 : i32, i32, i32
  }
}

</mosaic_0001>

<llo_original>
// kernel: tpu_custom_call.1
$region0: #{tpu_custom_call.1}
  #allocation0 [shape = 'u32[]', space=smem, size = 0x4, offset = 0x4, fixed_abs, tag = 'smem constant byte address 0x4 - core index']
  #allocation1 [shape = 'u32[72,128]{1,0:T(1,128)}', space=vmem, size = 0x9000, scoped, tag = 'internal scratch']
  %s0 = inlined_call_operand.vmem [shape: f32[2,8,32], index: 0, kind: input, shape index: {}]
  %s1 = inlined_call_operand.vmem [shape: f32[1,32], index: 1, kind: input, shape index: {}]
  %s2 = inlined_call_operand.vmem [shape: f32[1,32], index: 2, kind: input, shape index: {}]
  %s3 = inlined_call_operand.vmem [shape: bf16[32,96], index: 3, kind: input, shape index: {}]
  %s4 = inlined_call_operand.vmem [shape: bf16[32,32], index: 4, kind: input, shape index: {}]
  %s5 = inlined_call_operand.vmem [shape: f32[1,32], index: 5, kind: input, shape index: {}]
  %s6 = inlined_call_operand.vmem [shape: f32[1,32], index: 6, kind: input, shape index: {}]
  %s7 = inlined_call_operand.vmem [shape: f32[1,32], index: 7, kind: input, shape index: {}]
  %s8 = inlined_call_operand.vmem [shape: bf16[32,128], index: 8, kind: input, shape index: {}]
  %s9 = inlined_call_operand.vmem [shape: f32[1,128], index: 9, kind: input, shape index: {}]
  %s10 = inlined_call_operand.vmem [shape: bf16[128,32], index: 10, kind: input, shape index: {}]
  %s11 = inlined_call_operand.vmem [shape: f32[1,32], index: 11, kind: input, shape index: {}]
  %s12 = inlined_call_operand.hbm [shape: f32[2,8,32], index: 12, kind: output, shape index: {}]
  %s13 = sld [smem:[#allocation0]]
  $region81: #{tpu_custom_call.1} parent=0
    _
  %s15 = ssub.s32 1, %s13
  %s16 = scalar_select 0, %s15, %s13
  $region1: #{tpu_custom_call.1} parent=0
    #allocation2 [shape = 'u8[8192]{0}', space=vmem, size = 0x2000, scoped, tag = 'output window, operand 0']
    #allocation3 [shape = 's32[2]{0}', space=sflag, size = 0x8, scoped, tag = 'scoped memory for tpu_custom_call.1']
    %17 = vsyncpa [#allocation3], 0
    %s18 = scalar_lea.sflag [#allocation3], 1
    %19 = vsyncpa %s18, 0
    loop: start=0, step=1, limit=4
    $region2: #{tpu_custom_call.1} parent=1 // loop_pre_header
      _
    $region3: #{tpu_custom_call.1} parent=1 // loop_header
      %s21 = sphi 0, %s25
      %p22 = scmp.ge.s32.totalorder %s21, 4
      %s31 = sphi 0, %s33
      %s34 = sphi 0, %s31
      %s35 = sphi 0, %s34
      %s51 = sphi 0, %s35
      %s55 = sphi 0, %s55
      %s57 = sphi 0, %s55
      %s58 = sphi 0, %s57
      %s72 = sphi 0, %s58
      %s76 = sphi 0, %s76
      %s78 = sphi 0, %s76
      %s79 = sphi 0, %s78
      %s93 = sphi 0, %s79
      %s97 = sphi 0, %s97
      %s99 = sphi 0, %s97
      %s100 = sphi 0, %s99
      %s114 = sphi 0, %s100
      %s118 = sphi 0, %s118
      %s120 = sphi 0, %s118
      %s121 = sphi 0, %s120
      %s135 = sphi 0, %s121
      %s139 = sphi 0, %s139
      %s141 = sphi 0, %s139
      %s142 = sphi 0, %s141
      %s156 = sphi 0, %s142
      %s160 = sphi 0, %s160
      %s162 = sphi 0, %s160
      %s163 = sphi 0, %s162
      %s177 = sphi 0, %s163
      %s181 = sphi 0, %s181
      %s183 = sphi 0, %s181
      %s184 = sphi 0, %s183
      %s198 = sphi 0, %s184
      %s202 = sphi 0, %s202
      %s204 = sphi 0, %s202
      %s205 = sphi 0, %s204
      %s219 = sphi 0, %s205
      %s223 = sphi 0, %s223
      %s225 = sphi 0, %s223
      %s226 = sphi 0, %s225
      %s240 = sphi 0, %s226
      %s244 = sphi 0, %s244
      %s246 = sphi 0, %s244
      %s247 = sphi 0, %s246
      %s261 = sphi 0, %s247
      %s265 = sphi 0, %s265
      %s267 = sphi 0, %s265
      %s268 = sphi 0, %s267
      %s282 = sphi 0, %s268
      %s288 = sphi 0, %s290
      %s291 = sphi 0, %s288
      %s292 = sphi 0, %s291
      %s308 = sphi 0, %s292
    $region4: #{tpu_custom_call.1} parent=1 // loop_header_branch
      %24 = sbr.rel (%p22) target = $region8
    $region5: #{tpu_custom_call.1} parent=1 // loop_body
      %s26 = ssub.s32 %s21, 1
      %s27 = ssub.s32 %s21, 2
      %s28 = sadd.s32 %s21, 1
      %s29 = ssub.s32 %s21, %s28
      %p30 = scmp.eq.s32.totalorder %s29, 0
      %s32 = sadd.s32 %s31, 1
      %s33 = scalar_select %p30, %s31, %s32
      %p36 = pneg %p30
      %p37 = scmp.eq.s32.totalorder %s21, 1
      %p38 = por %p36, %p37
      %p39 = scmp.ne.s32.totalorder %s31, %s34
      %p40 = scmp.eq.s32.totalorder %s21, 0
      %p41 = por %p39, %p40
      %p42 = scmp.ne.s32.totalorder %s31, %s34
      %p43 = scmp.eq.s32.totalorder %s26, 1
      %p44 = por %p42, %p43
      %p45 = scmp.ne.s32.totalorder %s34, %s35
      %p46 = scmp.eq.s32.totalorder %s26, 0
      %p47 = por %p45, %p46
      %p48 = scmp.ne.s32.totalorder %s34, %s35
      %p49 = scmp.eq.s32.totalorder %s27, 1
      %p50 = por %p48, %p49
      %p52 = scmp.ne.s32.totalorder %s35, %s51
      %p53 = scmp.eq.s32.totalorder %s27, 0
      %p54 = por %p52, %p53
      %s56 = sadd.s32 %s55, 1
      %p59 = scmp.eq.s32.totalorder %s21, 1
      %p60 = scmp.ne.s32.totalorder %s55, %s57
      %p61 = scmp.eq.s32.totalorder %s21, 0
      %p62 = por %p60, %p61
      %p63 = scmp.ne.s32.totalorder %s55, %s57
      %p64 = scmp.eq.s32.totalorder %s26, 1
      %p65 = por %p63, %p64
      %p66 = scmp.ne.s32.totalorder %s57, %s58
      %p67 = scmp.eq.s32.totalorder %s26, 0
      %p68 = por %p66, %p67
      %p69 = scmp.ne.s32.totalorder %s57, %s58
      %p70 = scmp.eq.s32.totalorder %s27, 1
      %p71 = por %p69, %p70
      %p73 = scmp.ne.s32.totalorder %s58, %s72
      %p74 = scmp.eq.s32.totalorder %s27, 0
      %p75 = por %p73, %p74
      %s77 = sadd.s32 %s76, 1
      %p80 = scmp.eq.s32.totalorder %s21, 1
      %p81 = scmp.ne.s32.totalorder %s76, %s78
      %p82 = scmp.eq.s32.totalorder %s21, 0
      %p83 = por %p81, %p82
      %p84 = scmp.ne.s32.totalorder %s76, %s78
      %p85 = scmp.eq.s32.totalorder %s26, 1
      %p86 = por %p84, %p85
      %p87 = scmp.ne.s32.totalorder %s78, %s79
      %p88 = scmp.eq.s32.totalorder %s26, 0
      %p89 = por %p87, %p88
      %p90 = scmp.ne.s32.totalorder %s78, %s79
      %p91 = scmp.eq.s32.totalorder %s27, 1
      %p92 = por %p90, %p91
      %p94 = scmp.ne.s32.totalorder %s79, %s93
      %p95 = scmp.eq.s32.totalorder %s27, 0
      %p96 = por %p94, %p95
      %s98 = sadd.s32 %s97, 1
      %p101 = scmp.eq.s32.totalorder %s21, 1
      %p102 = scmp.ne.s32.totalorder %s97, %s99
      %p103 = scmp.eq.s32.totalorder %s21, 0
      %p104 = por %p102, %p103
      %p105 = scmp.ne.s32.totalorder %s97, %s99
      %p106 = scmp.eq.s32.totalorder %s26, 1
      %p107 = por %p105, %p106
      %p108 = scmp.ne.s32.totalorder %s99, %s100
      %p109 = scmp.eq.s32.totalorder %s26, 0
      %p110 = por %p108, %p109
      %p111 = scmp.ne.s32.totalorder %s99, %s100
      %p112 = scmp.eq.s32.totalorder %s27, 1
      %p113 = por %p111, %p112
      %p115 = scmp.ne.s32.totalorder %s100, %s114
      %p116 = scmp.eq.s32.totalorder %s27, 0
      %p117 = por %p115, %p116
      %s119 = sadd.s32 %s118, 1
      %p122 = scmp.eq.s32.totalorder %s21, 1
      %p123 = scmp.ne.s32.totalorder %s118, %s120
      %p124 = scmp.eq.s32.totalorder %s21, 0
      %p125 = por %p123, %p124
      %p126 = scmp.ne.s32.totalorder %s118, %s120
      %p127 = scmp.eq.s32.totalorder %s26, 1
      %p128 = por %p126, %p127
      %p129 = scmp.ne.s32.totalorder %s120, %s121
      %p130 = scmp.eq.s32.totalorder %s26, 0
      %p131 = por %p129, %p130
      %p132 = scmp.ne.s32.totalorder %s120, %s121
      %p133 = scmp.eq.s32.totalorder %s27, 1
      %p134 = por %p132, %p133
      %p136 = scmp.ne.s32.totalorder %s121, %s135
      %p137 = scmp.eq.s32.totalorder %s27, 0
      %p138 = por %p136, %p137
      %s140 = sadd.s32 %s139, 1
      %p143 = scmp.eq.s32.totalorder %s21, 1
      %p144 = scmp.ne.s32.totalorder %s139, %s141
      %p145 = scmp.eq.s32.totalorder %s21, 0
      %p146 = por %p144, %p145
      %p147 = scmp.ne.s32.totalorder %s139, %s141
      %p148 = scmp.eq.s32.totalorder %s26, 1
      %p149 = por %p147, %p148
      %p150 = scmp.ne.s32.totalorder %s141, %s142
      %p151 = scmp.eq.s32.totalorder %s26, 0
      %p152 = por %p150, %p151
      %p153 = scmp.ne.s32.totalorder %s141, %s142
      %p154 = scmp.eq.s32.totalorder %s27, 1
      %p155 = por %p153, %p154
      %p157 = scmp.ne.s32.totalorder %s142, %s156
      %p158 = scmp.eq.s32.totalorder %s27, 0
      %p159 = por %p157, %p158
      %s161 = sadd.s32 %s160, 1
      %p164 = scmp.eq.s32.totalorder %s21, 1
      %p165 = scmp.ne.s32.totalorder %s160, %s162
      %p166 = scmp.eq.s32.totalorder %s21, 0
      %p167 = por %p165, %p166
      %p168 = scmp.ne.s32.totalorder %s160, %s162
      %p169 = scmp.eq.s32.totalorder %s26, 1
      %p170 = por %p168, %p169
      %p171 = scmp.ne.s32.totalorder %s162, %s163
      %p172 = scmp.eq.s32.totalorder %s26, 0
      %p173 = por %p171, %p172
      %p174 = scmp.ne.s32.totalorder %s162, %s163
      %p175 = scmp.eq.s32.totalorder %s27, 1
      %p176 = por %p174, %p175
      %p178 = scmp.ne.s32.totalorder %s163, %s177
      %p179 = scmp.eq.s32.totalorder %s27, 0
      %p180 = por %p178, %p179
      %s182 = sadd.s32 %s181, 1
      %p185 = scmp.eq.s32.totalorder %s21, 1
      %p186 = scmp.ne.s32.totalorder %s181, %s183
      %p187 = scmp.eq.s32.totalorder %s21, 0
      %p188 = por %p186, %p187
      %p189 = scmp.ne.s32.totalorder %s181, %s183
      %p190 = scmp.eq.s32.totalorder %s26, 1
      %p191 = por %p189, %p190
      %p192 = scmp.ne.s32.totalorder %s183, %s184
      %p193 = scmp.eq.s32.totalorder %s26, 0
      %p194 = por %p192, %p193
      %p195 = scmp.ne.s32.totalorder %s183, %s184
      %p196 = scmp.eq.s32.totalorder %s27, 1
      %p197 = por %p195, %p196
      %p199 = scmp.ne.s32.totalorder %s184, %s198
      %p200 = scmp.eq.s32.totalorder %s27, 0
      %p201 = por %p199, %p200
      %s203 = sadd.s32 %s202, 1
      %p206 = scmp.eq.s32.totalorder %s21, 1
      %p207 = scmp.ne.s32.totalorder %s202, %s204
      %p208 = scmp.eq.s32.totalorder %s21, 0
      %p209 = por %p207, %p208
      %p210 = scmp.ne.s32.totalorder %s202, %s204
      %p211 = scmp.eq.s32.totalorder %s26, 1
      %p212 = por %p210, %p211
      %p213 = scmp.ne.s32.totalorder %s204, %s205
      %p214 = scmp.eq.s32.totalorder %s26, 0
      %p215 = por %p213, %p214
      %p216 = scmp.ne.s32.totalorder %s204, %s205
      %p217 = scmp.eq.s32.totalorder %s27, 1
      %p218 = por %p216, %p217
      %p220 = scmp.ne.s32.totalorder %s205, %s219
      %p221 = scmp.eq.s32.totalorder %s27, 0
      %p222 = por %p220, %p221
      %s224 = sadd.s32 %s223, 1
      %p227 = scmp.eq.s32.totalorder %s21, 1
      %p228 = scmp.ne.s32.totalorder %s223, %s225
      %p229 = scmp.eq.s32.totalorder %s21, 0
      %p230 = por %p228, %p229
      %p231 = scmp.ne.s32.totalorder %s223, %s225
      %p232 = scmp.eq.s32.totalorder %s26, 1
      %p233 = por %p231, %p232
      %p234 = scmp.ne.s32.totalorder %s225, %s226
      %p235 = scmp.eq.s32.totalorder %s26, 0
      %p236 = por %p234, %p235
      %p237 = scmp.ne.s32.totalorder %s225, %s226
      %p238 = scmp.eq.s32.totalorder %s27, 1
      %p239 = por %p237, %p238
      %p241 = scmp.ne.s32.totalorder %s226, %s240
      %p242 = scmp.eq.s32.totalorder %s27, 0
      %p243 = por %p241, %p242
      %s245 = sadd.s32 %s244, 1
      %p248 = scmp.eq.s32.totalorder %s21, 1
      %p249 = scmp.ne.s32.totalorder %s244, %s246
      %p250 = scmp.eq.s32.totalorder %s21, 0
      %p251 = por %p249, %p250
      %p252 = scmp.ne.s32.totalorder %s244, %s246
      %p253 = scmp.eq.s32.totalorder %s26, 1
      %p254 = por %p252, %p253
      %p255 = scmp.ne.s32.totalorder %s246, %s247
      %p256 = scmp.eq.s32.totalorder %s26, 0
      %p257 = por %p255, %p256
      %p258 = scmp.ne.s32.totalorder %s246, %s247
      %p259 = scmp.eq.s32.totalorder %s27, 1
      %p260 = por %p258, %p259
      %p262 = scmp.ne.s32.totalorder %s247, %s261
      %p263 = scmp.eq.s32.totalorder %s27, 0
      %p264 = por %p262, %p263
      %s266 = sadd.s32 %s265, 1
      %p269 = scmp.eq.s32.totalorder %s21, 1
      %p270 = scmp.ne.s32.totalorder %s265, %s267
      %p271 = scmp.eq.s32.totalorder %s21, 0
      %p272 = por %p270, %p271
      %p273 = scmp.ne.s32.totalorder %s265, %s267
      %p274 = scmp.eq.s32.totalorder %s26, 1
      %p275 = por %p273, %p274
      %p276 = scmp.ne.s32.totalorder %s267, %s268
      %p277 = scmp.eq.s32.totalorder %s26, 0
      %p278 = por %p276, %p277
      %p279 = scmp.ne.s32.totalorder %s267, %s268
      %p280 = scmp.eq.s32.totalorder %s27, 1
      %p281 = por %p279, %p280
      %p283 = scmp.ne.s32.totalorder %s268, %s282
      %p284 = scmp.eq.s32.totalorder %s27, 0
      %p285 = por %p283, %p284
      %s286 = ssub.s32 %s21, %s28
      %p287 = scmp.eq.s32.totalorder %s286, 0
      %s289 = sadd.s32 %s288, 1
      %s290 = scalar_select %p287, %s288, %s289
      %p293 = pneg %p287
      %p294 = scmp.eq.s32.totalorder %s21, 1
      %p295 = por %p293, %p294
      %p296 = scmp.ne.s32.totalorder %s288, %s291
      %p297 = scmp.eq.s32.totalorder %s21, 0
      %p298 = por %p296, %p297
      %p299 = scmp.ne.s32.totalorder %s288, %s291
      %p300 = scmp.eq.s32.totalorder %s26, 1
      %p301 = por %p299, %p300
      %p302 = scmp.ne.s32.totalorder %s291, %s292
      %p303 = scmp.eq.s32.totalorder %s26, 0
      %p304 = por %p302, %p303
      %p305 = scmp.ne.s32.totalorder %s291, %s292
      %p306 = scmp.eq.s32.totalorder %s27, 1
      %p307 = por %p305, %p306
      %p309 = scmp.ne.s32.totalorder %s292, %s308
      %p310 = scmp.eq.s32.totalorder %s27, 0
      %p311 = por %p309, %p310
      %p312 = scmp.le.s32.totalorder 1, %s21
      %p313 = scmp.lt.s32.totalorder %s21, 3
      %p314 = pnand %p312, %p313
      %p315 = pneg %p314
      // Predicated region
      $region9: #{tpu_custom_call.1} parent=5 // pred_check
        _
      $region10: #{tpu_custom_call.1} parent=5 // pred_check_branch
        %317 = sbr.rel (%p314) target = $region12
      $region11: #{tpu_custom_call.1} parent=5 // pred_region
        %s318 = ssub.s32 %s21, 1
        // Predicated region
        $region13: #{tpu_custom_call.1} parent=11 // pred_check
          %p319 = pneg %p68
        $region14: #{tpu_custom_call.1} parent=11 // pred_check_branch
          %321 = sbr.rel (%p319) target = $region16
        $region15: #{tpu_custom_call.1} parent=11 // pred_region
          _
        $region16: #{tpu_custom_call.1} parent=11 // pred_fallthru
          _
        // Predicated region
        $region17: #{tpu_custom_call.1} parent=11 // pred_check
          %p322 = pneg %p89
        $region18: #{tpu_custom_call.1} parent=11 // pred_check_branch
          %324 = sbr.rel (%p322) target = $region20
        $region19: #{tpu_custom_call.1} parent=11 // pred_region
          _
        $region20: #{tpu_custom_call.1} parent=11 // pred_fallthru
          _
        // Predicated region
        $region21: #{tpu_custom_call.1} parent=11 // pred_check
          %p325 = pneg %p110
        $region22: #{tpu_custom_call.1} parent=11 // pred_check_branch
          %327 = sbr.rel (%p325) target = $region24
        $region23: #{tpu_custom_call.1} parent=11 // pred_region
          _
        $region24: #{tpu_custom_call.1} parent=11 // pred_fallthru
          _
        // Predicated region
        $region25: #{tpu_custom_call.1} parent=11 // pred_check
          %p328 = pneg %p131
        $region26: #{tpu_custom_call.1} parent=11 // pred_check_branch
          %330 = sbr.rel (%p328) target = $region28
        $region27: #{tpu_custom_call.1} parent=11 // pred_region
          _
        $region28: #{tpu_custom_call.1} parent=11 // pred_fallthru
          _
        // Predicated region
        $region29: #{tpu_custom_call.1} parent=11 // pred_check
          %p331 = pneg %p152
        $region30: #{tpu_custom_call.1} parent=11 // pred_check_branch
          %333 = sbr.rel (%p331) target = $region32
        $region31: #{tpu_custom_call.1} parent=11 // pred_region
          _
        $region32: #{tpu_custom_call.1} parent=11 // pred_fallthru
          _
        // Predicated region
        $region33: #{tpu_custom_call.1} parent=11 // pred_check
          %p334 = pneg %p173
        $region34: #{tpu_custom_call.1} parent=11 // pred_check_branch
          %336 = sbr.rel (%p334) target = $region36
        $region35: #{tpu_custom_call.1} parent=11 // pred_region
          _
        $region36: #{tpu_custom_call.1} parent=11 // pred_fallthru
          _
        // Predicated region
        $region37: #{tpu_custom_call.1} parent=11 // pred_check
          %p337 = pneg %p194
        $region38: #{tpu_custom_call.1} parent=11 // pred_check_branch
          %339 = sbr.rel (%p337) target = $region40
        $region39: #{tpu_custom_call.1} parent=11 // pred_region
          _
        $region40: #{tpu_custom_call.1} parent=11 // pred_fallthru
          _
        // Predicated region
        $region41: #{tpu_custom_call.1} parent=11 // pred_check
          %p340 = pneg %p215
        $region42: #{tpu_custom_call.1} parent=11 // pred_check_branch
          %342 = sbr.rel (%p340) target = $region44
        $region43: #{tpu_custom_call.1} parent=11 // pred_region
          _
        $region44: #{tpu_custom_call.1} parent=11 // pred_fallthru
          _
        // Predicated region
        $region45: #{tpu_custom_call.1} parent=11 // pred_check
          %p343 = pneg %p236
        $region46: #{tpu_custom_call.1} parent=11 // pred_check_branch
          %345 = sbr.rel (%p343) target = $region48
        $region47: #{tpu_custom_call.1} parent=11 // pred_region
          _
        $region48: #{tpu_custom_call.1} parent=11 // pred_fallthru
          _
        // Predicated region
        $region49: #{tpu_custom_call.1} parent=11 // pred_check
          %p346 = pneg %p257
        $region50: #{tpu_custom_call.1} parent=11 // pred_check_branch
          %348 = sbr.rel (%p346) target = $region52
        $region51: #{tpu_custom_call.1} parent=11 // pred_region
          _
        $region52: #{tpu_custom_call.1} parent=11 // pred_fallthru
          _
        // Predicated region
        $region53: #{tpu_custom_call.1} parent=11 // pred_check
          %p349 = pneg %p278
        $region54: #{tpu_custom_call.1} parent=11 // pred_check_branch
          %351 = sbr.rel (%p349) target = $region56
        $region55: #{tpu_custom_call.1} parent=11 // pred_region
          _
        $region56: #{tpu_custom_call.1} parent=11 // pred_fallthru
          _
      $region12: #{tpu_custom_call.1} parent=5 // pred_fallthru
        _
      %p352 = scmp.lt.s32.totalorder %s21, 2
      // Predicated region
      $region57: #{tpu_custom_call.1} parent=5 // pred_check
        %p353 = pneg %p352
      $region58: #{tpu_custom_call.1} parent=5 // pred_check_branch
        %355 = sbr.rel (%p353) target = $region60
      $region59: #{tpu_custom_call.1} parent=5 // pred_region
        // Predicated region
        $region61: #{tpu_custom_call.1} parent=59 // pred_check
          %p356 = pneg %p41
        $region62: #{tpu_custom_call.1} parent=59 // pred_check_branch
          %358 = sbr.rel (%p356) target = $region64
        $region63: #{tpu_custom_call.1} parent=59 // pred_region
          %p359 = scmp.lt.s32.totalorder %s21, 1
          %s360 = scalar_select %p359, %s21, 1
          %s361 = smul.addr %s360, 8
          %s362 = scalar_lea.vmem %s0, %s361
        $region64: #{tpu_custom_call.1} parent=59 // pred_fallthru
          _
      $region60: #{tpu_custom_call.1} parent=5 // pred_fallthru
        _
      %p363 = scmp.le.s32.totalorder 1, %s21
      %p364 = scmp.lt.s32.totalorder %s21, 3
      %p365 = pnand %p363, %p364
      %p366 = pneg %p365
      // Predicated region
      $region65: #{tpu_custom_call.1} parent=5 // pred_check
        _
      $region66: #{tpu_custom_call.1} parent=5 // pred_check_branch
        %368 = sbr.rel (%p365) target = $region68
      $region67: #{tpu_custom_call.1} parent=5 // pred_region
        %s369 = ssub.s32 %s21, 1
        %p370 = scmp.lt.s32.totalorder %s26, 1
        %s371 = scalar_select %p370, %s26, 1
        %s372 = smul.addr %s371, 8
        %s373 = scalar_lea.vmem %s0, %s372
        %p374 = pneg %p47
        %p375 = pneg %p44
        %p376 = pneg %p68
        %p377 = pneg %p65
        %p378 = pneg %p89
        %p379 = pneg %p86
        %p380 = pneg %p110
        %p381 = pneg %p107
        %p382 = pneg %p131
        %p383 = pneg %p128
        %p384 = pneg %p152
        %p385 = pneg %p149
        %p386 = pneg %p173
        %p387 = pneg %p170
        %p388 = pneg %p194
        %p389 = pneg %p191
        %p390 = pneg %p215
        %p391 = pneg %p212
        %p392 = pneg %p236
        %p393 = pneg %p233
        %p394 = pneg %p257
        %p395 = pneg %p254
        %p396 = pneg %p278
        %p397 = pneg %p275
        %p398 = pneg %p304
        %p399 = pneg %p301
        %s400 = sand.u32 %s291, 1
        %s401 = scalar_lea.sflag [#allocation3], %s400
        %s402 = sand.u32 %s291, 1
        %s403 = smul.addr %s402, 8
        %s404 = scalar_lea.vmem [#allocation2], %s403
        %p405 = scmp.lt.s32.totalorder %s26, 1
        %s406 = scalar_select %p405, %s26, 1
        %s407 = smul.addr %s406, 8
        %s408 = scalar_lea.vmem %s0, %s407
        %v410 = vld [vmem:[%s408] sm:$0xff]
        %v411 = vld [vmem:[%s1] sm:$0x1]
        %v412 = vld [vmem:[%s2] sm:$0x1]
        %vm413 = vcmask 261120
        %v414 = vsel %vm413, %v410, 0.0
        %415 = vadd.xlane.f32.xlu0 %v414
        %v416 = vpop.xlane.xlu0 %415
        %v417 = vrcp.pop 32.0
        %v418 = vmul.f32 32.0, %v417
        %v419 = vsub.f32 1.0, %v418
        %v420 = vmul.f32 %v417, %v419
        %v421 = vadd.f32 %v417, %v420
        %vm422 = vweird.f32 %v417
        %v423 = vsel %vm422, %v417, %v421
        %v424 = vmul.f32 %v416, %v423
        %v425 = vsub.f32 %v410, %v424
        %v426 = vmul.f32 %v425, %v425
        %v427 = vsel %vm413, %v426, 0.0
        %428 = vadd.xlane.f32.xlu0 %v427
        %v429 = vpop.xlane.xlu0 %428
        %v430 = vmul.f32 %v429, %v423
        %v431 = vadd.f32 %v430, 1e-05
        %v432 = vrsqrt.pop %v431
        %v433 = vmul.f32 %v432, %v431
        %v434 = vmul.f32 %v433, %v432
        %v435 = vmul.f32 0.5, %v434
        %v436 = vsub.f32 1.5, %v435
        %v437 = vmul.f32 %v432, %v436
        %vm438 = vweird.f32 %v431
        %vm439 = vweird.f32 %v432
        %vm440 = vmor %vm438, %vm439
        %v441 = vsel %vm440, %v432, %v437
        %v442 = vmul.f32 %v425, %v441
        %v444 = vperm.slane %v411, 0
        %v446 = vmul.f32 %v442, %v444
        %v448 = vperm.slane %v412, 0
        %v450 = vadd.f32 %v446, %v448
        %v451 = vpack.c.bf16 %v450, %v450
        %v452 = vld [vmem:[%s3] sm:$0xf]
        %v453 = vld [vmem:[%s3 + $0x4] sm:$0xf]
        %v454 = vld [vmem:[%s3 + $0x8] sm:$0xf]
        %v455 = vld [vmem:[%s3 + $0xc] sm:$0xf]
        %v460 = vunpack.c.l.b16 %v452
        %v461 = vunpack.c.l.b16 %v453
        %v462 = vunpack.c.l.b16 %v454
        %v463 = vunpack.c.l.b16 %v455
        %v464 = vpack.c.b16 %v461, %v460
        %v465 = vpack.c.b16 %v463, %v462
        %v469 = vsel %vm413, %v451, 0
        %471 = vmatpush.bf16.msra.mxu0 0
        %472 = vmatpush.bf16.msra.mxu0 0
        %473 = vmatpush.bf16.msra.mxu0 0
        %474 = vmatpush.bf16.msra.mxu0 0
        %475 = vmatpush.bf16.msra.mxu0 0
        %476 = vmatpush.bf16.msra.mxu0 0
        %477 = vmatpush.bf16.msra.mxu0 %v465
        %478 = vmatpush.bf16.msra.mxu0 %v464
        %479 = vmatmul.bf16.gmra.mxu0 %v469
        %v480 = vpop.f32.mrf.mxu0
        %v481 = vadd.f32 0.0, %v480
        %v482 = vpop.f32.mrf.mxu0
        %483 = vdwg.mxu0
        %v484 = vpack.c.bf16 %v481, %v481
        %486 = vrot.lane.b32.xlu0 %v481, 96
        %v487 = vpop.permute.xlu0 %486
        %489 = vxpose.xlu0.b32.start [1/16] %v487, 128
        %490 = vxpose.xlu0.b32.cont [2/16] 0.0, 128
        %491 = vxpose.xlu0.b32.cont [3/16] 0.0, 128
        %492 = vxpose.xlu0.b32.cont [4/16] 0.0, 128
        %493 = vxpose.xlu0.b32.cont [5/16] 0.0, 128
        %494 = vxpose.xlu0.b32.cont [6/16] 0.0, 128
        %495 = vxpose.xlu0.b32.cont [7/16] 0.0, 128
        %496 = vxpose.xlu0.b32.cont [8/16] 0.0, 128
        %497 = vxpose.xlu0.b32.cont [9/16] 0.0, 128
        %498 = vxpose.xlu0.b32.cont [10/16] 0.0, 128
        %499 = vxpose.xlu0.b32.cont [11/16] 0.0, 128
        %500 = vxpose.xlu0.b32.cont [12/16] 0.0, 128
        %501 = vxpose.xlu0.b32.cont [13/16] 0.0, 128
        %502 = vxpose.xlu0.b32.cont [14/16] 0.0, 128
        %503 = vxpose.xlu0.b32.cont [15/16] 0.0, 128
        %504 = vxpose.xlu0.b32.end [16/16] 0.0, 128
        %v505 = vpop.trf.xlu0
        %v506 = vpop.trf.xlu0
        %v507 = vpop.trf.xlu0
        %v508 = vpop.trf.xlu0
        %v509 = vpop.trf.xlu0
        %v510 = vpop.trf.xlu0
        %v511 = vpop.trf.xlu0
        %v512 = vpop.trf.xlu0
        %v513 = vpop.trf.xlu0
        %v514 = vpop.trf.xlu0
        %v515 = vpop.trf.xlu0
        %v516 = vpop.trf.xlu0
        %v517 = vpop.trf.xlu0
        %v518 = vpop.trf.xlu0
        %v519 = vpop.trf.xlu0
        %v520 = vpop.trf.xlu0
        %v521 = vpack.c.bf16 %v505, %v505
        %vm522 = vcmask 64512
        %v524 = vsel %vm522, %v484, 0
        %vm526 = vcmask 1043456
        %v528 = vsel %vm526, %v521, 0
        %530 = vmatpush.bf16.msra.mxu0 0
        %531 = vmatpush.bf16.msra.mxu0 0
        %532 = vmatpush.bf16.msra.mxu0 0
        %533 = vmatpush.bf16.msra.mxu0 0
        %534 = vmatpush.bf16.msra.mxu0 0
        %535 = vmatpush.bf16.msra.mxu0 0
        %536 = vmatpush.bf16.msra.mxu0 0
        %537 = vmatpush.bf16.msra.mxu0 %v528
        %538 = vmatmul.bf16.gmra.mxu0 %v524
        %v539 = vpop.f32.mrf.mxu0
        %v540 = vadd.f32 0.0, %v539
        %v541 = vpop.f32.mrf.mxu0
        %542 = vdwg.mxu0
        %v543 = vsel %vm522, %v540, -inf
        %544 = vmax.xlane.f32.xlu0 %v543
        %v545 = vpop.xlane.xlu0 %544
        %v546 = vsub.f32 %v540, %v545
        %v547 = vmul.f32 %v546, 1.442695
        %v548 = vpow.pop %v547
        %v549 = vsel %vm522, %v548, 0.0
        %550 = vadd.xlane.f32.xlu0 %v549
        %v551 = vpop.xlane.xlu0 %550
        %v552 = vrcp.pop %v551
        %v553 = vmul.f32 %v548, %v552
        %v554 = vpack.c.bf16 %v553, %v553
        %556 = vrot.lane.b32.xlu0 %v484, 64
        %v557 = vpop.permute.xlu0 %556
        %v559 = vsel %vm522, %v554, 0
        %v562 = vsel %vm526, %v557, 0
        %564 = vmatpush.bf16.msra.mxu0 0
        %565 = vmatpush.bf16.msra.mxu0 0
        %566 = vmatpush.bf16.msra.mxu0 0
        %567 = vmatpush.bf16.msra.mxu0 0
        %568 = vmatpush.bf16.msra.mxu0 0
        %569 = vmatpush.bf16.msra.mxu0 0
        %570 = vmatpush.bf16.msra.mxu0 0
        %571 = vmatpush.bf16.msra.mxu0 %v562
        %572 = vmatmul.bf16.gmra.mxu0 %v559
        %v573 = vpop.f32.mrf.mxu0
        %v574 = vadd.f32 0.0, %v573
        %v575 = vpop.f32.mrf.mxu0
        %576 = vdwg.mxu0
        %v577 = vpack.c.bf16 %v574, %v574
        %v578 = vld [vmem:[%s4] sm:$0xf]
        %579 = vrot.lane.b32.xlu0 %v481, 88
        %v580 = vpop.permute.xlu0 %579
        %582 = vxpose.xlu0.b32.start [1/16] %v580, 128
        %583 = vxpose.xlu0.b32.cont [2/16] 0.0, 128
        %584 = vxpose.xlu0.b32.cont [3/16] 0.0, 128
        %585 = vxpose.xlu0.b32.cont [4/16] 0.0, 128
        %586 = vxpose.xlu0.b32.cont [5/16] 0.0, 128
        %587 = vxpose.xlu0.b32.cont [6/16] 0.0, 128
        %588 = vxpose.xlu0.b32.cont [7/16] 0.0, 128
        %589 = vxpose.xlu0.b32.cont [8/16] 0.0, 128
        %590 = vxpose.xlu0.b32.cont [9/16] 0.0, 128
        %591 = vxpose.xlu0.b32.cont [10/16] 0.0, 128
        %592 = vxpose.xlu0.b32.cont [11/16] 0.0, 128
        %593 = vxpose.xlu0.b32.cont [12/16] 0.0, 128
        %594 = vxpose.xlu0.b32.cont [13/16] 0.0, 128
        %595 = vxpose.xlu0.b32.cont [14/16] 0.0, 128
        %596 = vxpose.xlu0.b32.cont [15/16] 0.0, 128
        %597 = vxpose.xlu0.b32.end [16/16] 0.0, 128
        %v598 = vpop.trf.xlu0
        %v599 = vpop.trf.xlu0
        %v600 = vpop.trf.xlu0
        %v601 = vpop.trf.xlu0
        %v602 = vpop.trf.xlu0
        %v603 = vpop.trf.xlu0
        %v604 = vpop.trf.xlu0
        %v605 = vpop.trf.xlu0
        %v606 = vpop.trf.xlu0
        %v607 = vpop.trf.xlu0
        %v608 = vpop.trf.xlu0
        %v609 = vpop.trf.xlu0
        %v610 = vpop.trf.xlu0
        %v611 = vpop.trf.xlu0
        %v612 = vpop.trf.xlu0
        %v613 = vpop.trf.xlu0
        %v614 = vpack.c.bf16 %v598, %v598
        %615 = vrot.lane.b32.xlu0 %v484, 120
        %v616 = vpop.permute.xlu0 %615
        %v618 = vsel %vm522, %v616, 0
        %v621 = vsel %vm526, %v614, 0
        %623 = vmatpush.bf16.msra.mxu0 0
        %624 = vmatpush.bf16.msra.mxu0 0
        %625 = vmatpush.bf16.msra.mxu0 0
        %626 = vmatpush.bf16.msra.mxu0 0
        %627 = vmatpush.bf16.msra.mxu0 0
        %628 = vmatpush.bf16.msra.mxu0 0
        %629 = vmatpush.bf16.msra.mxu0 0
        %630 = vmatpush.bf16.msra.mxu0 %v621
        %631 = vmatmul.bf16.gmra.mxu0 %v618
        %v632 = vpop.f32.mrf.mxu0
        %v633 = vadd.f32 0.0, %v632
        %v634 = vpop.f32.mrf.mxu0
        %635 = vdwg.mxu0
        %v636 = vsel %vm522, %v633, -inf
        %637 = vmax.xlane.f32.xlu0 %v636
        %v638 = vpop.xlane.xlu0 %637
        %v639 = vsub.f32 %v633, %v638
        %v640 = vmul.f32 %v639, 1.442695
        %v641 = vpow.pop %v640
        %v642 = vsel %vm522, %v641, 0.0
        %643 = vadd.xlane.f32.xlu0 %v642
        %v644 = vpop.xlane.xlu0 %643
        %v645 = vrcp.pop %v644
        %v646 = vmul.f32 %v641, %v645
        %v647 = vpack.c.bf16 %v646, %v646
        %648 = vrot.lane.b32.xlu0 %v484, 56
        %v649 = vpop.permute.xlu0 %648
        %v651 = vsel %vm522, %v647, 0
        %v654 = vsel %vm526, %v649, 0
        %656 = vmatpush.bf16.msra.mxu0 0
        %657 = vmatpush.bf16.msra.mxu0 0
        %658 = vmatpush.bf16.msra.mxu0 0
        %659 = vmatpush.bf16.msra.mxu0 0
        %660 = vmatpush.bf16.msra.mxu0 0
        %661 = vmatpush.bf16.msra.mxu0 0
        %662 = vmatpush.bf16.msra.mxu0 0
        %663 = vmatpush.bf16.msra.mxu0 %v654
        %664 = vmatmul.bf16.gmra.mxu0 %v651
        %v665 = vpop.f32.mrf.mxu0
        %v666 = vadd.f32 0.0, %v665
        %v667 = vpop.f32.mrf.mxu0
        %668 = vdwg.mxu0
        %v669 = vpack.c.bf16 %v666, %v666
        %v670 = vld [vmem:[%s4 + $0x4] sm:$0xf]
        %v672 = vsel %vm522, %v669, 0
        %v675 = vsel %vm526, %v670, 0
        %677 = vmatpush.bf16.msra.mxu0 0
        %678 = vmatpush.bf16.msra.mxu0 0
        %679 = vmatpush.bf16.msra.mxu0 0
        %680 = vmatpush.bf16.msra.mxu0 0
        %681 = vmatpush.bf16.msra.mxu0 0
        %682 = vmatpush.bf16.msra.mxu0 0
        %683 = vmatpush.bf16.msra.mxu0 0
        %684 = vmatpush.bf16.msra.mxu0 %v675
        %685 = vmatmul.bf16.gmra.mxu0 %v672
        %v686 = vpop.f32.mrf.mxu0
        %v687 = vadd.f32 0.0, %v686
        %v688 = vpop.f32.mrf.mxu0
        %689 = vdwg.mxu0
        %v691 = vsel %vm522, %v577, 0
        %v694 = vsel %vm526, %v578, 0
        %696 = vmatpush.bf16.msra.mxu0 0
        %697 = vmatpush.bf16.msra.mxu0 0
        %698 = vmatpush.bf16.msra.mxu0 0
        %699 = vmatpush.bf16.msra.mxu0 0
        %700 = vmatpush.bf16.msra.mxu0 0
        %701 = vmatpush.bf16.msra.mxu0 0
        %702 = vmatpush.bf16.msra.mxu0 0
        %703 = vmatpush.bf16.msra.mxu0 %v694
        %704 = vmatmul.bf16.gmra.mxu0 %v691
        %v705 = vpop.f32.mrf.mxu0
        %v706 = vadd.f32 %v687, %v705
        %v707 = vpop.f32.mrf.mxu0
        %708 = vdwg.mxu0
        %709 = vrot.lane.b32.xlu0 %v481, 80
        %v710 = vpop.permute.xlu0 %709
        %712 = vxpose.xlu0.b32.start [1/16] %v710, 128
        %713 = vxpose.xlu0.b32.cont [2/16] 0.0, 128
        %714 = vxpose.xlu0.b32.cont [3/16] 0.0, 128
        %715 = vxpose.xlu0.b32.cont [4/16] 0.0, 128
        %716 = vxpose.xlu0.b32.cont [5/16] 0.0, 128
        %717 = vxpose.xlu0.b32.cont [6/16] 0.0, 128
        %718 = vxpose.xlu0.b32.cont [7/16] 0.0, 128
        %719 = vxpose.xlu0.b32.cont [8/16] 0.0, 128
        %720 = vxpose.xlu0.b32.cont [9/16] 0.0, 128
        %721 = vxpose.xlu0.b32.cont [10/16] 0.0, 128
        %722 = vxpose.xlu0.b32.cont [11/16] 0.0, 128
        %723 = vxpose.xlu0.b32.cont [12/16] 0.0, 128
        %724 = vxpose.xlu0.b32.cont [13/16] 0.0, 128
        %725 = vxpose.xlu0.b32.cont [14/16] 0.0, 128
        %726 = vxpose.xlu0.b32.cont [15/16] 0.0, 128
        %727 = vxpose.xlu0.b32.end [16/16] 0.0, 128
        %v728 = vpop.trf.xlu0
        %v729 = vpop.trf.xlu0
        %v730 = vpop.trf.xlu0
        %v731 = vpop.trf.xlu0
        %v732 = vpop.trf.xlu0
        %v733 = vpop.trf.xlu0
        %v734 = vpop.trf.xlu0
        %v735 = vpop.trf.xlu0
        %v736 = vpop.trf.xlu0
        %v737 = vpop.trf.xlu0
        %v738 = vpop.trf.xlu0
        %v739 = vpop.trf.xlu0
        %v740 = vpop.trf.xlu0
        %v741 = vpop.trf.xlu0
        %v742 = vpop.trf.xlu0
        %v743 = vpop.trf.xlu0
        %v744 = vpack.c.bf16 %v728, %v728
        %745 = vrot.lane.b32.xlu0 %v484, 112
        %v746 = vpop.permute.xlu0 %745
        %v748 = vsel %vm522, %v746, 0
        %v751 = vsel %vm526, %v744, 0
        %753 = vmatpush.bf16.msra.mxu0 0
        %754 = vmatpush.bf16.msra.mxu0 0
        %755 = vmatpush.bf16.msra.mxu0 0
        %756 = vmatpush.bf16.msra.mxu0 0
        %757 = vmatpush.bf16.msra.mxu0 0
        %758 = vmatpush.bf16.msra.mxu0 0
        %759 = vmatpush.bf16.msra.mxu0 0
        %760 = vmatpush.bf16.msra.mxu0 %v751
        %761 = vmatmul.bf16.gmra.mxu0 %v748
        %v762 = vpop.f32.mrf.mxu0
        %v763 = vadd.f32 0.0, %v762
        %v764 = vpop.f32.mrf.mxu0
        %765 = vdwg.mxu0
        %v766 = vsel %vm522, %v763, -inf
        %767 = vmax.xlane.f32.xlu0 %v766
        %v768 = vpop.xlane.xlu0 %767
        %v769 = vsub.f32 %v763, %v768
        %v770 = vmul.f32 %v769, 1.442695
        %v771 = vpow.pop %v770
        %v772 = vsel %vm522, %v771, 0.0
        %773 = vadd.xlane.f32.xlu0 %v772
        %v774 = vpop.xlane.xlu0 %773
        %v775 = vrcp.pop %v774
        %v776 = vmul.f32 %v771, %v775
        %v777 = vpack.c.bf16 %v776, %v776
        %778 = vrot.lane.b32.xlu0 %v484, 48
        %v779 = vpop.permute.xlu0 %778
        %v781 = vsel %vm522, %v777, 0
        %v784 = vsel %vm526, %v779, 0
        %786 = vmatpush.bf16.msra.mxu0 0
        %787 = vmatpush.bf16.msra.mxu0 0
        %788 = vmatpush.bf16.msra.mxu0 0
        %789 = vmatpush.bf16.msra.mxu0 0
        %790 = vmatpush.bf16.msra.mxu0 0
        %791 = vmatpush.bf16.msra.mxu0 0
        %792 = vmatpush.bf16.msra.mxu0 0
        %793 = vmatpush.bf16.msra.mxu0 %v784
        %794 = vmatmul.bf16.gmra.mxu0 %v781
        %v795 = vpop.f32.mrf.mxu0
        %v796 = vadd.f32 0.0, %v795
        %v797 = vpop.f32.mrf.mxu0
        %798 = vdwg.mxu0
        %v799 = vpack.c.bf16 %v796, %v796
        %v800 = vld [vmem:[%s4 + $0x8] sm:$0xf]
        %v802 = vsel %vm522, %v799, 0
        %v805 = vsel %vm526, %v800, 0
        %807 = vmatpush.bf16.msra.mxu0 0
        %808 = vmatpush.bf16.msra.mxu0 0
        %809 = vmatpush.bf16.msra.mxu0 0
        %810 = vmatpush.bf16.msra.mxu0 0
        %811 = vmatpush.bf16.msra.mxu0 0
        %812 = vmatpush.bf16.msra.mxu0 0
        %813 = vmatpush.bf16.msra.mxu0 0
        %814 = vmatpush.bf16.msra.mxu0 %v805
        %815 = vmatmul.bf16.gmra.mxu0 %v802
        %v816 = vpop.f32.mrf.mxu0
        %v817 = vadd.f32 0.0, %v816
        %v818 = vpop.f32.mrf.mxu0
        %819 = vdwg.mxu0
        %v820 = vadd.f32 %v706, %v817
        %821 = vrot.lane.b32.xlu0 %v481, 72
        %v822 = vpop.permute.xlu0 %821
        %824 = vxpose.xlu0.b32.start [1/16] %v822, 128
        %825 = vxpose.xlu0.b32.cont [2/16] 0.0, 128
        %826 = vxpose.xlu0.b32.cont [3/16] 0.0, 128
        %827 = vxpose.xlu0.b32.cont [4/16] 0.0, 128
        %828 = vxpose.xlu0.b32.cont [5/16] 0.0, 128
        %829 = vxpose.xlu0.b32.cont [6/16] 0.0, 128
        %830 = vxpose.xlu0.b32.cont [7/16] 0.0, 128
        %831 = vxpose.xlu0.b32.cont [8/16] 0.0, 128
        %832 = vxpose.xlu0.b32.cont [9/16] 0.0, 128
        %833 = vxpose.xlu0.b32.cont [10/16] 0.0, 128
        %834 = vxpose.xlu0.b32.cont [11/16] 0.0, 128
        %835 = vxpose.xlu0.b32.cont [12/16] 0.0, 128
        %836 = vxpose.xlu0.b32.cont [13/16] 0.0, 128
        %837 = vxpose.xlu0.b32.cont [14/16] 0.0, 128
        %838 = vxpose.xlu0.b32.cont [15/16] 0.0, 128
        %839 = vxpose.xlu0.b32.end [16/16] 0.0, 128
        %v840 = vpop.trf.xlu0
        %v841 = vpop.trf.xlu0
        %v842 = vpop.trf.xlu0
        %v843 = vpop.trf.xlu0
        %v844 = vpop.trf.xlu0
        %v845 = vpop.trf.xlu0
        %v846 = vpop.trf.xlu0
        %v847 = vpop.trf.xlu0
        %v848 = vpop.trf.xlu0
        %v849 = vpop.trf.xlu0
        %v850 = vpop.trf.xlu0
        %v851 = vpop.trf.xlu0
        %v852 = vpop.trf.xlu0
        %v853 = vpop.trf.xlu0
        %v854 = vpop.trf.xlu0
        %v855 = vpop.trf.xlu0
        %v856 = vpack.c.bf16 %v840, %v840
        %857 = vrot.lane.b32.xlu0 %v484, 104
        %v858 = vpop.permute.xlu0 %857
        %v860 = vsel %vm522, %v858, 0
        %v863 = vsel %vm526, %v856, 0
        %865 = vmatpush.bf16.msra.mxu0 0
        %866 = vmatpush.bf16.msra.mxu0 0
        %867 = vmatpush.bf16.msra.mxu0 0
        %868 = vmatpush.bf16.msra.mxu0 0
        %869 = vmatpush.bf16.msra.mxu0 0
        %870 = vmatpush.bf16.msra.mxu0 0
        %871 = vmatpush.bf16.msra.mxu0 0
        %872 = vmatpush.bf16.msra.mxu0 %v863
        %873 = vmatmul.bf16.gmra.mxu0 %v860
        %v874 = vpop.f32.mrf.mxu0
        %v875 = vadd.f32 0.0, %v874
        %v876 = vpop.f32.mrf.mxu0
        %877 = vdwg.mxu0
        %v878 = vsel %vm522, %v875, -inf
        %879 = vmax.xlane.f32.xlu0 %v878
        %v880 = vpop.xlane.xlu0 %879
        %v881 = vsub.f32 %v875, %v880
        %v882 = vmul.f32 %v881, 1.442695
        %v883 = vpow.pop %v882
        %v884 = vsel %vm522, %v883, 0.0
        %885 = vadd.xlane.f32.xlu0 %v884
        %v886 = vpop.xlane.xlu0 %885
        %v887 = vrcp.pop %v886
        %v888 = vmul.f32 %v883, %v887
        %v889 = vpack.c.bf16 %v888, %v888
        %890 = vrot.lane.b32.xlu0 %v484, 40
        %v891 = vpop.permute.xlu0 %890
        %v893 = vsel %vm522, %v889, 0
        %v896 = vsel %vm526, %v891, 0
        %898 = vmatpush.bf16.msra.mxu0 0
        %899 = vmatpush.bf16.msra.mxu0 0
        %900 = vmatpush.bf16.msra.mxu0 0
        %901 = vmatpush.bf16.msra.mxu0 0
        %902 = vmatpush.bf16.msra.mxu0 0
        %903 = vmatpush.bf16.msra.mxu0 0
        %904 = vmatpush.bf16.msra.mxu0 0
        %905 = vmatpush.bf16.msra.mxu0 %v896
        %906 = vmatmul.bf16.gmra.mxu0 %v893
        %v907 = vpop.f32.mrf.mxu0
        %v908 = vadd.f32 0.0, %v907
        %v909 = vpop.f32.mrf.mxu0
        %910 = vdwg.mxu0
        %v911 = vpack.c.bf16 %v908, %v908
        %v912 = vld [vmem:[%s4 + $0xc] sm:$0xf]
        %v914 = vsel %vm522, %v911, 0
        %v917 = vsel %vm526, %v912, 0
        %919 = vmatpush.bf16.msra.mxu0 0
        %920 = vmatpush.bf16.msra.mxu0 0
        %921 = vmatpush.bf16.msra.mxu0 0
        %922 = vmatpush.bf16.msra.mxu0 0
        %923 = vmatpush.bf16.msra.mxu0 0
        %924 = vmatpush.bf16.msra.mxu0 0
        %925 = vmatpush.bf16.msra.mxu0 0
        %926 = vmatpush.bf16.msra.mxu0 %v917
        %927 = vmatmul.bf16.gmra.mxu0 %v914
        %v928 = vpop.f32.mrf.mxu0
        %v929 = vadd.f32 0.0, %v928
        %v930 = vpop.f32.mrf.mxu0
        %931 = vdwg.mxu0
        %v932 = vadd.f32 %v820, %v929
        %v933 = vadd.f32 %v410, %v932
        %v934 = vld [vmem:[%s5] sm:$0x1]
        %v936 = vperm.slane %v934, 0
        %v938 = vadd.f32 %v933, %v936
        %v939 = vld [vmem:[%s6] sm:$0x1]
        %v940 = vld [vmem:[%s7] sm:$0x1]
        %v941 = vsel %vm413, %v938, 0.0
        %942 = vadd.xlane.f32.xlu0 %v941
        %v943 = vpop.xlane.xlu0 %942
        %v944 = vmul.f32 %v943, %v423
        %v945 = vsub.f32 %v938, %v944
        %v946 = vmul.f32 %v945, %v945
        %v947 = vsel %vm413, %v946, 0.0
        %948 = vadd.xlane.f32.xlu0 %v947
        %v949 = vpop.xlane.xlu0 %948
        %v950 = vmul.f32 %v949, %v423
        %v951 = vadd.f32 %v950, 1e-05
        %v952 = vrsqrt.pop %v951
        %v953 = vmul.f32 %v952, %v951
        %v954 = vmul.f32 %v953, %v952
        %v955 = vmul.f32 0.5, %v954
        %v956 = vsub.f32 1.5, %v955
        %v957 = vmul.f32 %v952, %v956
        %vm958 = vweird.f32 %v951
        %vm959 = vweird.f32 %v952
        %vm960 = vmor %vm958, %vm959
        %v961 = vsel %vm960, %v952, %v957
        %v962 = vmul.f32 %v945, %v961
        %v964 = vperm.slane %v939, 0
        %v966 = vmul.f32 %v962, %v964
        %v968 = vperm.slane %v940, 0
        %v970 = vadd.f32 %v966, %v968
        %v971 = vpack.c.bf16 %v970, %v970
        %v972 = vld [vmem:[%s8] sm:$0xf]
        %v973 = vld [vmem:[%s8 + $0x4] sm:$0xf]
        %v974 = vld [vmem:[%s8 + $0x8] sm:$0xf]
        %v975 = vld [vmem:[%s8 + $0xc] sm:$0xf]
        %v976 = vld [vmem:[%s9] sm:$0x1]
        %v978 = vperm.slane %v976, 0
        %v984 = vunpack.c.l.b16 %v972
        %v985 = vunpack.c.l.b16 %v973
        %v986 = vunpack.c.l.b16 %v974
        %v987 = vunpack.c.l.b16 %v975
        %v988 = vpack.c.b16 %v985, %v984
        %v989 = vpack.c.b16 %v987, %v986
        %v993 = vsel %vm413, %v971, 0
        %995 = vmatpush.bf16.msra.mxu0 0
        %996 = vmatpush.bf16.msra.mxu0 0
        %997 = vmatpush.bf16.msra.mxu0 0
        %998 = vmatpush.bf16.msra.mxu0 0
        %999 = vmatpush.bf16.msra.mxu0 0
        %1000 = vmatpush.bf16.msra.mxu0 0
        %1001 = vmatpush.bf16.msra.mxu0 %v989
        %1002 = vmatpush.bf16.msra.mxu0 %v988
        %1003 = vmatmul.bf16.gmra.mxu0 %v993
        %v1004 = vpop.f32.mrf.mxu0
        %v1005 = vadd.f32 %v978, %v1004
        %v1006 = vpop.f32.mrf.mxu0
        %1007 = vdwg.mxu0
        %v1008 = vmul.f32 %v1005, 0.5
        %v1009 = vmul.f32 %v1005, %v1005
        %v1010 = vmul.f32 %v1009, %v1005
        %v1011 = vmul.f32 %v1010, 0.044715
        %v1012 = vadd.f32 %v1005, %v1011
        %v1013 = vmul.f32 %v1012, 0.7978846
        %v1014 = vtanh.pop %v1013
        %v1015 = vadd.f32 %v1014, 1.0
        %v1016 = vmul.f32 %v1008, %v1015
        %v1017 = vpack.c.bf16 %v1016, %v1016
        %v1018 = vld [vmem:[%s10] sm:$0xf]
        %v1019 = vld [vmem:[%s10 + $0x4] sm:$0xf]
        %v1020 = vld [vmem:[%s10 + $0x8] sm:$0xf]
        %v1021 = vld [vmem:[%s10 + $0xc] sm:$0xf]
        %v1022 = vld [vmem:[%s10 + $0x10] sm:$0xf]
        %v1023 = vld [vmem:[%s10 + $0x14] sm:$0xf]
        %v1024 = vld [vmem:[%s10 + $0x18] sm:$0xf]
        %v1025 = vld [vmem:[%s10 + $0x1c] sm:$0xf]
        %v1026 = vld [vmem:[%s10 + $0x20] sm:$0xf]
        %v1027 = vld [vmem:[%s10 + $0x24] sm:$0xf]
        %v1028 = vld [vmem:[%s10 + $0x28] sm:$0xf]
        %v1029 = vld [vmem:[%s10 + $0x2c] sm:$0xf]
        %v1030 = vld [vmem:[%s10 + $0x30] sm:$0xf]
        %v1031 = vld [vmem:[%s10 + $0x34] sm:$0xf]
        %v1032 = vld [vmem:[%s10 + $0x38] sm:$0xf]
        %v1033 = vld [vmem:[%s10 + $0x3c] sm:$0xf]
        %v1034 = vld [vmem:[%s11] sm:$0x1]
        %v1036 = vperm.slane %v1034, 0
        %v1054 = vunpack.c.l.b16 %v1018
        %v1055 = vunpack.c.l.b16 %v1019
        %v1056 = vunpack.c.l.b16 %v1020
        %v1057 = vunpack.c.l.b16 %v1021
        %v1058 = vunpack.c.l.b16 %v1022
        %v1059 = vunpack.c.l.b16 %v1023
        %v1060 = vunpack.c.l.b16 %v1024
        %v1061 = vunpack.c.l.b16 %v1025
        %v1062 = vunpack.c.l.b16 %v1026
        %v1063 = vunpack.c.l.b16 %v1027
        %v1064 = vunpack.c.l.b16 %v1028
        %v1065 = vunpack.c.l.b16 %v1029
        %v1066 = vunpack.c.l.b16 %v1030
        %v1067 = vunpack.c.l.b16 %v1031
        %v1068 = vunpack.c.l.b16 %v1032
        %v1069 = vunpack.c.l.b16 %v1033
        %v1070 = vpack.c.b16 %v1055, %v1054
        %v1071 = vpack.c.b16 %v1057, %v1056
        %v1072 = vpack.c.b16 %v1059, %v1058
        %v1073 = vpack.c.b16 %v1061, %v1060
        %v1074 = vpack.c.b16 %v1063, %v1062
        %v1075 = vpack.c.b16 %v1065, %v1064
        %v1076 = vpack.c.b16 %v1067, %v1066
        %v1077 = vpack.c.b16 %v1069, %v1068
        %1086 = vmatpush.bf16.msra.mxu0 %v1077
        %1087 = vmatpush.bf16.msra.mxu0 %v1076
        %1088 = vmatpush.bf16.msra.mxu0 %v1075
        %1089 = vmatpush.bf16.msra.mxu0 %v1074
        %1090 = vmatpush.bf16.msra.mxu0 %v1073
        %1091 = vmatpush.bf16.msra.mxu0 %v1072
        %1092 = vmatpush.bf16.msra.mxu0 %v1071
        %1093 = vmatpush.bf16.msra.mxu0 %v1070
        %1094 = vmatmul.bf16.gmra.mxu0 %v1017
        %v1095 = vpop.f32.mrf.mxu0
        %v1096 = vadd.f32 %v1036, %v1095
        %v1097 = vpop.f32.mrf.mxu0
        %1098 = vdwg.mxu0
        %v1099 = vadd.f32 %v938, %v1096
        %1100 = vst.msk [vmem:[%s404] sm:$0xff] %vm413, %v1099
        %s1101 = sand.u32 %s291, 1
        %s1102 = scalar_lea.sflag [#allocation3], %s1101
        %s1103 = sand.u32 %s291, 1
        %s1104 = smul.addr %s1103, 8
        %s1105 = scalar_lea.vmem [#allocation2], %s1104
        // Predicated region
        $region69: #{tpu_custom_call.1} parent=67 // pred_check
          %p1106 = pneg %p301
        $region70: #{tpu_custom_call.1} parent=67 // pred_check_branch
          %1108 = sbr.rel (%p1106) target = $region72
        $region71: #{tpu_custom_call.1} parent=67 // pred_region
          %1110 = vsyncadd %s1102, 0
          %s1111 = smul.addr %s26, 8
          %s1112 = scalar_lea.hbm %s12, %s1111
          %s1114 = sshll.u32 %s1105, 4
          %s1115 = int_to_ptr.vmem [resolvable:$true] %s1114
          %s1116 = sshll.u32 %s1112, 4
          %s1117 = int_to_ptr.hbm [resolvable:$true] %s1116
          %1119 = dma.vmem_to_hbm [thread:$0]  %s1115, 128, %s1117, %s1102
        $region72: #{tpu_custom_call.1} parent=67 // pred_fallthru
          _
      $region68: #{tpu_custom_call.1} parent=5 // pred_fallthru
        _
      %p1120 = scmp.le.s32.totalorder 2, %s21
      // Predicated region
      $region73: #{tpu_custom_call.1} parent=5 // pred_check
        %p1121 = pneg %p1120
      $region74: #{tpu_custom_call.1} parent=5 // pred_check_branch
        %1123 = sbr.rel (%p1121) target = $region76
      $region75: #{tpu_custom_call.1} parent=5 // pred_region
        %s1124 = ssub.s32 %s21, 2
        // Predicated region
        $region77: #{tpu_custom_call.1} parent=75 // pred_check
          %p1125 = pneg %p307
        $region78: #{tpu_custom_call.1} parent=75 // pred_check_branch
          %1127 = sbr.rel (%p1125) target = $region80
        $region79: #{tpu_custom_call.1} parent=75 // pred_region
          %s1128 = sand.u32 %s292, 1
          %s1129 = scalar_lea.sflag [#allocation3], %s1128
          %s1130 = sand.u32 %s292, 1
          %s1131 = smul.addr %s1130, 8
          %s1132 = scalar_lea.vmem [#allocation2], %s1131
          %1134 = dma.done %s1129, 128
        $region80: #{tpu_custom_call.1} parent=75 // pred_fallthru
          _
      $region76: #{tpu_custom_call.1} parent=5 // pred_fallthru
        _
    $region6: #{tpu_custom_call.1} parent=1 // loop_footer
      %s25 = sadd.s32 1, %s21
    $region7: #{tpu_custom_call.1} parent=1 // loop_footer_branch
      %20 = sbr.rel target = $region3
    $region8: #{tpu_custom_call.1} parent=1 // loop_exit
      _
    %1135 = vsyncpa [#allocation3], 1
    %s1136 = scalar_lea.sflag [#allocation3], 1
    %1137 = vsyncpa %s1136, 1

</llo_original>
